<compile_context>
chip_gen: v7x
topology: tpu7x:2x2x1
jax: 0.10.0
libtpu: 0.0.40
codegen_flags: <defaults>
</compile_context>

<pallas_src>
import functools

import jax
import jax.numpy as jnp
import numpy as np
from jax import lax
from jax.experimental import pallas as pl
from jax.experimental.pallas import tpu as pltpu

LEAKY_SLOPE = 0.01        # torch.nn.LeakyReLU default negative_slope
BN_EPS = 1e-5             # torch.nn.BatchNorm2d default eps
LANES = 128
SUBLANES = 8
_EXACT = 1 << 21          # f32 floor-divide index decode is exact below this


def _round_up(x, m):
    return (x + m - 1) // m * m


def _fdiv_mod(idx_f, div):
    """(idx // div, idx % div) for small non-negative integers held in f32.

    Uses mul/floor/sub only (no vector integer divide on the VPU); the +0.5 guard
    makes the result exact for idx < 2**21 (statically asserted in the wrapper)."""
    q = jnp.floor((idx_f + 0.5) * (1.0 / div))
    return q, idx_f - q * div


def _f_iota(shape, dim):
    return lax.broadcasted_iota(jnp.int32, shape, dim).astype(jnp.float32)


# ----------------------------------------------------------------------------
# Fused kernel: BN-fold + LeakyReLU + mask + state scatter/gather + conv + bias
#
# The padded activation lives as a flat lane-dense (C_inp, FLATP) value.  For conv tap
# (kh, kw) the input element for output (n, h, w) sits at flat position
# base(n,h,w) + kh*W_pad + kw, so each tap is a statically shifted window of the same
# value.  The windows are stacked along sublanes into one (KH*KW*C_inp, FLATP) slab and
# contracted with the stacked weights in a single bf16 MXU matmul.  Lanes that do not
# decode to a valid (n, h_out, w_out) are garbage and are discarded by the wrapper;
# kept lanes only ever read positions < FLAT (structural invariant, see asserts).
# ----------------------------------------------------------------------------
def _blockx_kernel(x_ref, st_ref, scale_ref, shift_ref, w_ref, b_ref,
                   y_ref, ns_ref, *,
                   N, H, W, P0, P2, H_pad, W_pad, KH, KW, take,
                   FLAT, FLATP, EXT, STP, TAILP, C_inp):
    f32 = jnp.float32
    HWp = H_pad * W_pad

    # --- fused BatchNorm affine + LeakyReLU (f32 elementwise; v5e VPU has no bf16) ----
    a = x_ref[...] * scale_ref[...] + shift_ref[...]                  # (C_inp, FLATP)
    a = jnp.where(a >= 0, a, LEAKY_SLOPE * a)

    # --- valid-data mask computed in-kernel (replaces the old m_flat HBM input) -------
    p = _f_iota((1, FLATP), 1)
    row, col = _fdiv_mod(p, W_pad)            # row = n*H_pad + h ; col = w
    _, hh = _fdiv_mod(row, H_pad)             # hh  = h
    valid = ((p < FLAT) & (col >= P0) & (col < P0 + W)
             & (hh >= P2) & (hh < P2 + H))
    a = jnp.where(valid, a, 0.0)

    if P0 > 0:
        # --- old-state insertion: one-hot scatter as a tiny exact f32 MXU matmul ------
        NS = N * H * P0
        j = _f_iota((STP, 1), 0)                        # compact old-state index
        t, w0 = _fdiv_mod(j, P0)                        # t = n*H + h
        n_i, h_i = _fdiv_mod(t, H)
        pos_ins = n_i * HWp + (P2 + h_i) * W_pad + w0   # (STP, 1)
        lane = _f_iota((1, FLATP), 1)
        m_ins = jnp.where((lane == pos_ins) & (j < NS), 1.0, 0.0)     # (STP, FLATP)
        a = a + jnp.dot(st_ref[...], m_ins, preferred_element_type=f32)

        # --- new streaming state: one-hot gather, also an exact f32 MXU matmul --------
        NT = N * H * take
        jt = _f_iota((1, TAILP), 1)                     # compact new-state index
        t, w0 = _fdiv_mod(jt, take)
        n_i, h_i = _fdiv_mod(t, H)
        pos_ext = n_i * HWp + (P2 + h_i) * W_pad + (P0 + W - take) + w0   # (1, TAILP)
        prow = _f_iota((FLATP, 1), 0)
        m_ext = jnp.where((prow == pos_ext) & (jt < NT), 1.0, 0.0)    # (FLATP, TAILP)
        ns_ref[...] = jnp.dot(a, m_ext, preferred_element_type=f32)
    else:
        ns_ref[...] = jnp.zeros_like(ns_ref)

    # --- conv: stacked im2col slab, ONE MXU matmul with K = KH*KW*C_inp ---------------
    # bf16 operands (native MXU path on all generations), f32 accumulation.
    if EXT > 0:
        a_wide = jnp.concatenate([a, jnp.zeros((C_inp, EXT), f32)], axis=1)
    else:
        a_wide = a
    wins = [a_wide[:, kh * W_pad + kw: kh * W_pad + kw + FLATP]
            for kh in range(KH) for kw in range(KW)]
    slab = jnp.concatenate(wins, axis=0) if len(wins) > 1 else wins[0]
    slab = slab.astype(jnp.bfloat16)                    # (KH*KW*C_inp, FLATP)
    y_ref[...] = b_ref[...] + jnp.dot(w_ref[...], slab,
                                      preferred_element_type=f32)


# ----------------------------------------------------------------------------
# BlockX.forward  (wrapper = layout plumbing only around the fused kernel)
# ----------------------------------------------------------------------------
def block_x_forward(params, x, state_old, *, ks, pad):
    """Returns (conv_out, new_state_list) exactly like BlockX.forward."""
    # TODO(synk): BatchNorm2d training-mode batch statistics / running-stat updates are
    # not implemented; this is the inference (running-stats) streaming path.
    KH, KW = ks
    N, C_in, H, W = x.shape
    C_out = params["conv_w"].shape[0]
    P0, P1, P2, P3 = (0, 0, 0, 0) if pad is None else tuple(pad)

    H_pad = H + P2 + P3
    W_pad = W + P0 + P1
    H_out = H_pad - KH + 1
    W_out = W_pad - KW + 1

    C_inp = _round_up(C_in, SUBLANES)      # channel dims padded to full sublane tiles
    C_outp = _round_up(C_out, SUBLANES)    # -> tile-aligned slab concat + aligned stores

    FLAT = N * H_pad * W_pad
    FLATP = _round_up(FLAT, LANES)         # lane-dense matmul free dim / output width
    MAXOFF = (KH - 1) * W_pad + (KW - 1)
    EXT = _round_up(FLATP + MAXOFF, LANES) - FLATP   # slab extension for the tap windows

    take = min(P0, W) if P0 > 0 else 1
    NS = N * H * P0
    NT = N * H * take
    STP = _round_up(max(NS, 1), LANES)
    TAILP = _round_up(max(NT, 1), LANES)

    # -- static correctness guards (garbage-lane / index-decode invariants) --
    assert FLATP + EXT >= FLAT + MAXOFF          # every tap window stays inside the slab
    assert max(FLATP, STP, TAILP) < _EXACT       # f32 floor-divide decode stays exact
    assert H_out > 0 and W_out > 0

    f32 = jnp.float32
    scale = (params["gamma"] / jnp.sqrt(params["running_var"] + BN_EPS)).astype(f32)
    shift = (params["beta"] - params["running_mean"] * scale).astype(f32)
    scale2 = jnp.pad(scale.reshape(C_in, 1), ((0, C_inp - C_in), (0, 0)))
    shift2 = jnp.pad(shift.reshape(C_in, 1), ((0, C_inp - C_in), (0, 0)))

    # raw input: transpose + zero-pad + flatten (layout plumbing, no math)
    xt = jnp.transpose(x.astype(f32), (1, 0, 2, 3))                     # (C_in, N, H, W)
    xp = jnp.pad(xt, ((0, C_inp - C_in), (0, 0), (P2, P3), (P0, P1)))
    x_flat = jnp.pad(xp.reshape(C_inp, FLAT), ((0, 0), (0, FLATP - FLAT)))

    # previous post-activation state, compact (C_inp, N*H*P0) -- no full-width carrier
    if P0 > 0:
        prev = state_old[0].astype(f32) if state_old else jnp.zeros((N, C_in, H, P0), f32)
        st_c = jnp.transpose(prev, (1, 0, 2, 3)).reshape(C_in, NS)
        st_c = jnp.pad(st_c, ((0, C_inp - C_in), (0, STP - NS)))
    else:
        prev = None
        st_c = jnp.zeros((C_inp, STP), f32)

    # conv weights stacked over taps: (C_outp, KH*KW*C_inp), bf16 MXU operands
    w4 = jnp.pad(params["conv_w"].astype(f32),
                 ((0, C_outp - C_out), (0, C_inp - C_in), (0, 0), (0, 0)))
    w_flat = jnp.transpose(w4, (0, 2, 3, 1)).reshape(C_outp, KH * KW * C_inp)
    w_flat = w_flat.astype(jnp.bfloat16)
    b2 = jnp.pad(params["conv_b"].astype(f32).reshape(C_out, 1),
                 ((0, C_outp - C_out), (0, 0)))

    kernel = functools.partial(
        _blockx_kernel,
        N=N, H=H, W=W, P0=P0, P2=P2, H_pad=H_pad, W_pad=W_pad, KH=KH, KW=KW,
        take=take, FLAT=FLAT, FLATP=FLATP, EXT=EXT, STP=STP, TAILP=TAILP,
        C_inp=C_inp)

    # grid=(1,): overhead-bound at these sizes.  At production sizes on v7x, split
    # FLATP over a leading "parallel" grid axis so the second TensorCore is used.
    y_flat, ns = pl.pallas_call(
        kernel,
        out_shape=(jax.ShapeDtypeStruct((C_outp, FLATP), f32),
                   jax.ShapeDtypeStruct((C_inp, TAILP), f32)),
        grid=(1,),
        in_specs=[
            pl.BlockSpec((C_inp, FLATP), lambda i: (0, 0)),             # padded raw input
            pl.BlockSpec((C_inp, STP), lambda i: (0, 0)),               # compact old state
            pl.BlockSpec((C_inp, 1), lambda i: (0, 0)),                 # BN scale
            pl.BlockSpec((C_inp, 1), lambda i: (0, 0)),                 # BN shift
            pl.BlockSpec((C_outp, KH * KW * C_inp), lambda i: (0, 0)),  # stacked weights
            pl.BlockSpec((C_outp, 1), lambda i: (0, 0)),                # bias
        ],
        out_specs=(
            pl.BlockSpec((C_outp, FLATP), lambda i: (0, 0)),            # lane-dense conv out
            pl.BlockSpec((C_inp, TAILP), lambda i: (0, 0)),             # compact new state
        ),
        compiler_params=pltpu.CompilerParams(
            dimension_semantics=("arbitrary",),
            vmem_limit_bytes=32 * 1024 * 1024),                         # fits all gens (v7x: 64 MiB phys)
    )(x_flat, st_c, scale2, shift2, w_flat, b2)

    # un-flatten: keep only lanes decoding to a valid (n, h_out, w_out)
    y = y_flat[:C_out, :FLAT].reshape(C_out, N, H_pad, W_pad)[:, :, :H_out, :W_out]
    y = jnp.transpose(y, (1, 0, 2, 3))

    new_states = []
    if P0 > 0:
        ns4 = jnp.transpose(ns[:C_in, :NT].reshape(C_in, N, H, take), (1, 0, 2, 3))
        if take < P0:   # streaming chunk narrower than the pad: carry part of old state
            ns4 = jnp.concatenate([prev[:, :, :, W:], ns4], axis=3)
        new_states.append(ns4)
    return y, new_states


# ----------------------------------------------------------------------------
# main
# ----------------------------------------------------------------------------
if __name__ == "__main__":
    inp_ch, out_ch = 4, 8
    ks = (3, 3)
    pad = (2, 0, 1, 1)          # (W_left via state, W_right, H_top, H_bottom)
    N, H, W = 2, 16, 8          # NCHW, W = time frames

    key = jax.random.PRNGKey(0)
    k1, k2, k3, k4, k5, k6, k7 = jax.random.split(key, 7)
    params = dict(
        gamma=jax.random.uniform(k1, (inp_ch,), jnp.float32, 0.5, 1.5),
        beta=0.1 * jax.random.normal(k2, (inp_ch,), jnp.float32),
        running_mean=0.1 * jax.random.normal(k3, (inp_ch,), jnp.float32),
        running_var=jax.random.uniform(k4, (inp_ch,), jnp.float32, 0.5, 1.5),
        conv_w=0.1 * jax.random.normal(k5, (out_ch, inp_ch, ks[0], ks[1]), jnp.float32),
        conv_b=0.1 * jax.random.normal(k6, (out_ch,), jnp.float32),
    )
    x = jax.random.normal(k7, (N, inp_ch, H, W), jnp.float32)

    fwd = jax.jit(functools.partial(block_x_forward, ks=ks, pad=pad))
    y, state = fwd(params, x, None)
    y = jax.block_until_ready(y)

    # ---- pure-JAX reference (inference BN, States.pad_left semantics) ----
    scale = params["gamma"] / jnp.sqrt(params["running_var"] + BN_EPS)
    shift = params["beta"] - params["running_mean"] * scale

    def ref_forward(xin, prev):
        a = xin * scale.reshape(1, -1, 1, 1) + shift.reshape(1, -1, 1, 1)
        a = jnp.where(a >= 0, a, LEAKY_SLOPE * a)
        left = prev if prev is not None else jnp.zeros(a.shape[:3] + (pad[0],), a.dtype)
        a_cat = jnp.concatenate([left, a], axis=3)
        new_state = a_cat[:, :, :, a_cat.shape[3] - pad[0]:]
        a_pad = jnp.pad(a_cat, ((0, 0), (0, 0), (pad[2], pad[3]), (0, pad[1])))
        yr = jax.lax.conv_general_dilated(
            a_pad, params["conv_w"], (1, 1), "VALID",
            dimension_numbers=("NCHW", "OIHW", "NCHW"))
        return yr + params["conv_b"].reshape(1, -1, 1, 1), new_state

    y_ref, st_ref = ref_forward(x, None)
    assert y.shape == (N, out_ch, H + pad[2] + pad[3] - ks[0] + 1,
                       W + pad[0] + pad[1] - ks[1] + 1)
    # conv path uses bf16 MXU operands (f32 accumulation) -> loosened tolerance
    np.testing.assert_allclose(np.asarray(y), np.asarray(y_ref), rtol=2e-2, atol=2e-2)
    assert len(state) == 1 and state[0].shape == (N, inp_ch, H, pad[0])
    # state path is exact f32 (one-hot gather) -> tight tolerance
    np.testing.assert_allclose(np.asarray(state[0]), np.asarray(st_ref),
                               rtol=1e-5, atol=1e-5)

    # ---- second streaming frame: exercises the carried-state path ----
    x2 = jax.random.normal(jax.random.PRNGKey(1), (N, inp_ch, H, W), jnp.float32)
    y2, state2 = fwd(params, x2, state)
    y2 = jax.block_until_ready(y2)
    y2_ref, st2_ref = ref_forward(x2, st_ref)
    np.testing.assert_allclose(np.asarray(y2), np.asarray(y2_ref), rtol=2e-2, atol=2e-2)
    np.testing.assert_allclose(np.asarray(state2[0]), np.asarray(st2_ref),
                               rtol=1e-5, atol=1e-5)

    print("KERNEL_OK")
</pallas_src>

<mosaic_0001>
module attributes {stable_mosaic.version = 11 : i64} {
  func.func @_blockx_kernel(%arg0: i32, %arg1: memref<8x384xf32, #tpu.memory_space<vmem>>, %arg2: memref<8x128xf32, #tpu.memory_space<vmem>>, %arg3: memref<8x1xf32, #tpu.memory_space<vmem>>, %arg4: memref<8x1xf32, #tpu.memory_space<vmem>>, %arg5: memref<8x72xbf16, #tpu.memory_space<vmem>>, %arg6: memref<8x1xf32, #tpu.memory_space<vmem>>, %arg7: memref<8x384xf32, #tpu.memory_space<vmem>>, %arg8: memref<8x128xf32, #tpu.memory_space<vmem>>) attributes {dimension_semantics = [#tpu.dimension_semantics<arbitrary>], iteration_bounds = array<i64: 1>, scalar_prefetch = 0 : i64, scratch_operands = 0 : i64, tpu.core_type = #tpu.core_type<tc>, window_params = [{pipeline_mode = #tpu.pipeline_mode<synchronous>, transform_indices = @transform_0, window_bounds = array<i64: 8, 384>}, {pipeline_mode = #tpu.pipeline_mode<synchronous>, transform_indices = @transform_1, window_bounds = array<i64: 8, 128>}, {pipeline_mode = #tpu.pipeline_mode<synchronous>, transform_indices = @transform_2, window_bounds = array<i64: 8, 1>}, {pipeline_mode = #tpu.pipeline_mode<synchronous>, transform_indices = @transform_3, window_bounds = array<i64: 8, 1>}, {pipeline_mode = #tpu.pipeline_mode<synchronous>, transform_indices = @transform_4, window_bounds = array<i64: 8, 72>}, {pipeline_mode = #tpu.pipeline_mode<synchronous>, transform_indices = @transform_5, window_bounds = array<i64: 8, 1>}, {pipeline_mode = #tpu.pipeline_mode<synchronous>, transform_indices = @transform_6, window_bounds = array<i64: 8, 384>}, {pipeline_mode = #tpu.pipeline_mode<synchronous>, transform_indices = @transform_7, window_bounds = array<i64: 8, 128>}]} {
    %c0 = arith.constant 0 : index
    %c0_0 = arith.constant 0 : index
    %0 = vector.load %arg1[%c0, %c0_0] : memref<8x384xf32, #tpu.memory_space<vmem>>, vector<8x384xf32>
    %c0_1 = arith.constant 0 : index
    %c0_2 = arith.constant 0 : index
    %1 = vector.load %arg3[%c0_1, %c0_2] : memref<8x1xf32, #tpu.memory_space<vmem>>, vector<8x1xf32>
    %2 = vector.broadcast %1 : vector<8x1xf32> to vector<8x384xf32>
    %3 = arith.mulf %0, %2 : vector<8x384xf32>
    %c0_3 = arith.constant 0 : index
    %c0_4 = arith.constant 0 : index
    %4 = vector.load %arg4[%c0_3, %c0_4] : memref<8x1xf32, #tpu.memory_space<vmem>>, vector<8x1xf32>
    %5 = vector.broadcast %4 : vector<8x1xf32> to vector<8x384xf32>
    %6 = arith.addf %3, %5 : vector<8x384xf32>
    %cst = arith.constant 0.000000e+00 : f32
    %7 = vector.broadcast %cst : f32 to vector<8x384xf32>
    %8 = arith.cmpf oge, %6, %7 : vector<8x384xf32>
    %cst_5 = arith.constant 0.00999999977 : f32
    %9 = vector.broadcast %cst_5 : f32 to vector<8x384xf32>
    %10 = arith.mulf %9, %6 : vector<8x384xf32>
    %11 = arith.select %8, %6, %10 : vector<8x384xi1>, vector<8x384xf32>
    %12 = tpu.iota {dimensions = array<i32: 1>} : vector<1x384xi32>
    %13 = arith.sitofp %12 : vector<1x384xi32> to vector<1x384xf32>
    %cst_6 = arith.constant 5.000000e-01 : f32
    %14 = vector.broadcast %cst_6 : f32 to vector<1x384xf32>
    %15 = arith.addf %13, %14 : vector<1x384xf32>
    %cst_7 = arith.constant 1.000000e-01 : f32
    %16 = vector.broadcast %cst_7 : f32 to vector<1x384xf32>
    %17 = arith.mulf %15, %16 : vector<1x384xf32>
    %18 = math.floor %17 : vector<1x384xf32>
    %cst_8 = arith.constant 1.000000e+01 : f32
    %19 = vector.broadcast %cst_8 : f32 to vector<1x384xf32>
    %20 = arith.mulf %18, %19 : vector<1x384xf32>
    %21 = arith.subf %13, %20 : vector<1x384xf32>
    %cst_9 = arith.constant 5.000000e-01 : f32
    %22 = vector.broadcast %cst_9 : f32 to vector<1x384xf32>
    %23 = arith.addf %18, %22 : vector<1x384xf32>
    %cst_10 = arith.constant 0.055555556 : f32
    %24 = vector.broadcast %cst_10 : f32 to vector<1x384xf32>
    %25 = arith.mulf %23, %24 : vector<1x384xf32>
    %26 = math.floor %25 : vector<1x384xf32>
    %cst_11 = arith.constant 1.800000e+01 : f32
    %27 = vector.broadcast %cst_11 : f32 to vector<1x384xf32>
    %28 = arith.mulf %26, %27 : vector<1x384xf32>
    %29 = arith.subf %18, %28 : vector<1x384xf32>
    %cst_12 = arith.constant 3.600000e+02 : f32
    %30 = vector.broadcast %cst_12 : f32 to vector<1x384xf32>
    %31 = arith.cmpf olt, %13, %30 : vector<1x384xf32>
    %cst_13 = arith.constant 2.000000e+00 : f32
    %32 = vector.broadcast %cst_13 : f32 to vector<1x384xf32>
    %33 = arith.cmpf oge, %21, %32 : vector<1x384xf32>
    %34 = arith.andi %31, %33 : vector<1x384xi1>
    %cst_14 = arith.constant 1.000000e+01 : f32
    %35 = vector.broadcast %cst_14 : f32 to vector<1x384xf32>
    %36 = arith.cmpf olt, %21, %35 : vector<1x384xf32>
    %37 = arith.andi %34, %36 : vector<1x384xi1>
    %cst_15 = arith.constant 1.000000e+00 : f32
    %38 = vector.broadcast %cst_15 : f32 to vector<1x384xf32>
    %39 = arith.cmpf oge, %29, %38 : vector<1x384xf32>
    %40 = arith.andi %37, %39 : vector<1x384xi1>
    %cst_16 = arith.constant 1.700000e+01 : f32
    %41 = vector.broadcast %cst_16 : f32 to vector<1x384xf32>
    %42 = arith.cmpf olt, %29, %41 : vector<1x384xf32>
    %43 = arith.andi %40, %42 : vector<1x384xi1>
    %cst_17 = arith.constant 0.000000e+00 : f32
    %44 = vector.shape_cast %43 : vector<1x384xi1> to vector<1x384xi1>
    %45 = vector.broadcast %44 : vector<1x384xi1> to vector<8x384xi1>
    %46 = vector.broadcast %cst_17 : f32 to vector<8x384xf32>
    %47 = arith.select %45, %11, %46 : vector<8x384xi1>, vector<8x384xf32>
    %48 = tpu.iota {dimensions = array<i32: 0>} : vector<128x1xi32>
    %49 = arith.sitofp %48 : vector<128x1xi32> to vector<128x1xf32>
    %cst_18 = arith.constant 5.000000e-01 : f32
    %50 = vector.broadcast %cst_18 : f32 to vector<128x1xf32>
    %51 = arith.addf %49, %50 : vector<128x1xf32>
    %cst_19 = arith.constant 5.000000e-01 : f32
    %52 = vector.broadcast %cst_19 : f32 to vector<128x1xf32>
    %53 = arith.mulf %51, %52 : vector<128x1xf32>
    %54 = math.floor %53 : vector<128x1xf32>
    %cst_20 = arith.constant 2.000000e+00 : f32
    %55 = vector.broadcast %cst_20 : f32 to vector<128x1xf32>
    %56 = arith.mulf %54, %55 : vector<128x1xf32>
    %57 = arith.subf %49, %56 : vector<128x1xf32>
    %cst_21 = arith.constant 5.000000e-01 : f32
    %58 = vector.broadcast %cst_21 : f32 to vector<128x1xf32>
    %59 = arith.addf %54, %58 : vector<128x1xf32>
    %cst_22 = arith.constant 6.250000e-02 : f32
    %60 = vector.broadcast %cst_22 : f32 to vector<128x1xf32>
    %61 = arith.mulf %59, %60 : vector<128x1xf32>
    %62 = math.floor %61 : vector<128x1xf32>
    %cst_23 = arith.constant 1.600000e+01 : f32
    %63 = vector.broadcast %cst_23 : f32 to vector<128x1xf32>
    %64 = arith.mulf %62, %63 : vector<128x1xf32>
    %65 = arith.subf %54, %64 : vector<128x1xf32>
    %cst_24 = arith.constant 1.800000e+02 : f32
    %66 = vector.broadcast %cst_24 : f32 to vector<128x1xf32>
    %67 = arith.mulf %62, %66 : vector<128x1xf32>
    %cst_25 = arith.constant 1.000000e+00 : f32
    %68 = vector.broadcast %cst_25 : f32 to vector<128x1xf32>
    %69 = arith.addf %68, %65 : vector<128x1xf32>
    %cst_26 = arith.constant 1.000000e+01 : f32
    %70 = vector.broadcast %cst_26 : f32 to vector<128x1xf32>
    %71 = arith.mulf %69, %70 : vector<128x1xf32>
    %72 = arith.addf %67, %71 : vector<128x1xf32>
    %73 = arith.addf %72, %57 : vector<128x1xf32>
    %74 = tpu.iota {dimensions = array<i32: 1>} : vector<1x384xi32>
    %75 = arith.sitofp %74 : vector<1x384xi32> to vector<1x384xf32>
    %76 = vector.broadcast %75 : vector<1x384xf32> to vector<128x384xf32>
    %77 = vector.broadcast %73 : vector<128x1xf32> to vector<128x384xf32>
    %78 = arith.cmpf oeq, %76, %77 : vector<128x384xf32>
    %cst_27 = arith.constant 6.400000e+01 : f32
    %79 = vector.broadcast %cst_27 : f32 to vector<128x1xf32>
    %80 = arith.cmpf olt, %49, %79 : vector<128x1xf32>
    %81 = vector.broadcast %80 : vector<128x1xi1> to vector<128x384xi1>
    %82 = arith.andi %78, %81 : vector<128x384xi1>
    %cst_28 = arith.constant 1.000000e+00 : f32
    %cst_29 = arith.constant 0.000000e+00 : f32
    %83 = vector.broadcast %cst_28 : f32 to vector<128x384xf32>
    %84 = vector.broadcast %cst_29 : f32 to vector<128x384xf32>
    %85 = arith.select %82, %83, %84 : vector<128x384xi1>, vector<128x384xf32>
    %c0_30 = arith.constant 0 : index
    %c0_31 = arith.constant 0 : index
    %86 = vector.load %arg2[%c0_30, %c0_31] : memref<8x128xf32, #tpu.memory_space<vmem>>, vector<8x128xf32>
    %cst_32 = arith.constant dense<0.000000e+00> : vector<8x384xf32>
    %87 = tpu.matmul %86, %85, %cst_32 {dimension_numbers = #tpu.dot_dimension_numbers<[1], [0], [0], [1], [0, 0, 1, 1], [], []>} : vector<8x128xf32>, vector<128x384xf32>, vector<8x384xf32> -> vector<8x384xf32>
    %88 = arith.addf %47, %87 : vector<8x384xf32>
    %89 = tpu.iota {dimensions = array<i32: 1>} : vector<1x128xi32>
    %90 = arith.sitofp %89 : vector<1x128xi32> to vector<1x128xf32>
    %cst_33 = arith.constant 5.000000e-01 : f32
    %91 = vector.broadcast %cst_33 : f32 to vector<1x128xf32>
    %92 = arith.addf %90, %91 : vector<1x128xf32>
    %cst_34 = arith.constant 5.000000e-01 : f32
    %93 = vector.broadcast %cst_34 : f32 to vector<1x128xf32>
    %94 = arith.mulf %92, %93 : vector<1x128xf32>
    %95 = math.floor %94 : vector<1x128xf32>
    %cst_35 = arith.constant 2.000000e+00 : f32
    %96 = vector.broadcast %cst_35 : f32 to vector<1x128xf32>
    %97 = arith.mulf %95, %96 : vector<1x128xf32>
    %98 = arith.subf %90, %97 : vector<1x128xf32>
    %cst_36 = arith.constant 5.000000e-01 : f32
    %99 = vector.broadcast %cst_36 : f32 to vector<1x128xf32>
    %100 = arith.addf %95, %99 : vector<1x128xf32>
    %cst_37 = arith.constant 6.250000e-02 : f32
    %101 = vector.broadcast %cst_37 : f32 to vector<1x128xf32>
    %102 = arith.mulf %100, %101 : vector<1x128xf32>
    %103 = math.floor %102 : vector<1x128xf32>
    %cst_38 = arith.constant 1.600000e+01 : f32
    %104 = vector.broadcast %cst_38 : f32 to vector<1x128xf32>
    %105 = arith.mulf %103, %104 : vector<1x128xf32>
    %106 = arith.subf %95, %105 : vector<1x128xf32>
    %cst_39 = arith.constant 1.800000e+02 : f32
    %107 = vector.broadcast %cst_39 : f32 to vector<1x128xf32>
    %108 = arith.mulf %103, %107 : vector<1x128xf32>
    %cst_40 = arith.constant 1.000000e+00 : f32
    %109 = vector.broadcast %cst_40 : f32 to vector<1x128xf32>
    %110 = arith.addf %109, %106 : vector<1x128xf32>
    %cst_41 = arith.constant 1.000000e+01 : f32
    %111 = vector.broadcast %cst_41 : f32 to vector<1x128xf32>
    %112 = arith.mulf %110, %111 : vector<1x128xf32>
    %113 = arith.addf %108, %112 : vector<1x128xf32>
    %cst_42 = arith.constant 8.000000e+00 : f32
    %114 = vector.broadcast %cst_42 : f32 to vector<1x128xf32>
    %115 = arith.addf %113, %114 : vector<1x128xf32>
    %116 = arith.addf %115, %98 : vector<1x128xf32>
    %117 = tpu.iota {dimensions = array<i32: 0>} : vector<384x1xi32>
    %118 = arith.sitofp %117 : vector<384x1xi32> to vector<384x1xf32>
    %119 = vector.broadcast %118 : vector<384x1xf32> to vector<384x128xf32>
    %120 = vector.broadcast %116 : vector<1x128xf32> to vector<384x128xf32>
    %121 = arith.cmpf oeq, %119, %120 : vector<384x128xf32>
    %cst_43 = arith.constant 6.400000e+01 : f32
    %122 = vector.broadcast %cst_43 : f32 to vector<1x128xf32>
    %123 = arith.cmpf olt, %90, %122 : vector<1x128xf32>
    %124 = vector.broadcast %123 : vector<1x128xi1> to vector<384x128xi1>
    %125 = arith.andi %121, %124 : vector<384x128xi1>
    %cst_44 = arith.constant 1.000000e+00 : f32
    %cst_45 = arith.constant 0.000000e+00 : f32
    %126 = vector.broadcast %cst_44 : f32 to vector<384x128xf32>
    %127 = vector.broadcast %cst_45 : f32 to vector<384x128xf32>
    %128 = arith.select %125, %126, %127 : vector<384x128xi1>, vector<384x128xf32>
    %cst_46 = arith.constant dense<0.000000e+00> : vector<8x128xf32>
    %129 = tpu.matmul %88, %128, %cst_46 {dimension_numbers = #tpu.dot_dimension_numbers<[1], [0], [0], [1], [0, 0, 1, 1], [], []>} : vector<8x384xf32>, vector<384x128xf32>, vector<8x128xf32> -> vector<8x128xf32>
    %c0_47 = arith.constant 0 : index
    %c0_48 = arith.constant 0 : index
    %130 = vector.load %arg8[%c0_47, %c0_48] : memref<8x128xf32, #tpu.memory_space<vmem>>, vector<8x128xf32>
    tpu.vector_store %arg8[%c0_47, %c0_48], %129 {strides = array<i32>} : memref<8x128xf32, #tpu.memory_space<vmem>>, vector<8x128xf32>,
    %cst_49 = arith.constant 0.000000e+00 : f32
    %131 = vector.broadcast %cst_49 : f32 to vector<8x128xf32>
    %132 = tpu.concatenate %88, %131 in 1 : vector<8x384xf32>, vector<8x128xf32> -> vector<8x512xf32>
    %133 = vector.extract_strided_slice %132 {offsets = [0, 0], sizes = [8, 384], strides = [1, 1]} : vector<8x512xf32> to vector<8x384xf32>
    %134 = vector.extract_strided_slice %132 {offsets = [0, 1], sizes = [8, 384], strides = [1, 1]} : vector<8x512xf32> to vector<8x384xf32>
    %135 = vector.extract_strided_slice %132 {offsets = [0, 2], sizes = [8, 384], strides = [1, 1]} : vector<8x512xf32> to vector<8x384xf32>
    %136 = vector.extract_strided_slice %132 {offsets = [0, 10], sizes = [8, 384], strides = [1, 1]} : vector<8x512xf32> to vector<8x384xf32>
    %137 = vector.extract_strided_slice %132 {offsets = [0, 11], sizes = [8, 384], strides = [1, 1]} : vector<8x512xf32> to vector<8x384xf32>
    %138 = vector.extract_strided_slice %132 {offsets = [0, 12], sizes = [8, 384], strides = [1, 1]} : vector<8x512xf32> to vector<8x384xf32>
    %139 = vector.extract_strided_slice %132 {offsets = [0, 20], sizes = [8, 384], strides = [1, 1]} : vector<8x512xf32> to vector<8x384xf32>
    %140 = vector.extract_strided_slice %132 {offsets = [0, 21], sizes = [8, 384], strides = [1, 1]} : vector<8x512xf32> to vector<8x384xf32>
    %141 = vector.extract_strided_slice %132 {offsets = [0, 22], sizes = [8, 384], strides = [1, 1]} : vector<8x512xf32> to vector<8x384xf32>
    %142 = tpu.concatenate %133, %134, %135, %136, %137, %138, %139, %140, %141 in 0 : vector<8x384xf32>, vector<8x384xf32>, vector<8x384xf32>, vector<8x384xf32>, vector<8x384xf32>, vector<8x384xf32>, vector<8x384xf32>, vector<8x384xf32>, vector<8x384xf32> -> vector<72x384xf32>
    %143 = arith.truncf %142 : vector<72x384xf32> to vector<72x384xbf16>
    %c0_50 = arith.constant 0 : index
    %c0_51 = arith.constant 0 : index
    %144 = vector.load %arg6[%c0_50, %c0_51] : memref<8x1xf32, #tpu.memory_space<vmem>>, vector<8x1xf32>
    %c0_52 = arith.constant 0 : index
    %c0_53 = arith.constant 0 : index
    %145 = vector.load %arg5[%c0_52, %c0_53] : memref<8x72xbf16, #tpu.memory_space<vmem>>, vector<8x72xbf16>
    %cst_54 = arith.constant dense<0.000000e+00> : vector<8x384xf32>
    %146 = tpu.matmul %145, %143, %cst_54 {dimension_numbers = #tpu.dot_dimension_numbers<[1], [0], [0], [1], [0, 0, 1, 1], [], []>} : vector<8x72xbf16>, vector<72x384xbf16>, vector<8x384xf32> -> vector<8x384xf32>
    %147 = vector.broadcast %144 : vector<8x1xf32> to vector<8x384xf32>
    %148 = arith.addf %147, %146 : vector<8x384xf32>
    %c0_55 = arith.constant 0 : index
    %c0_56 = arith.constant 0 : index
    %149 = vector.load %arg7[%c0_55, %c0_56] : memref<8x384xf32, #tpu.memory_space<vmem>>, vector<8x384xf32>
    tpu.vector_store %arg7[%c0_55, %c0_56], %148 {strides = array<i32>} : memref<8x384xf32, #tpu.memory_space<vmem>>, vector<8x384xf32>,
    return
  }
  func.func @transform_0(%arg0: i32) -> (i32, i32) {
    %c0_i32 = arith.constant 0 : i32
    %c0_i32_0 = arith.constant 0 : i32
    %c0_i32_1 = arith.constant 0 : i32
    return %c0_i32, %c0_i32_0 : i32, i32
  }
  func.func @transform_1(%arg0: i32) -> (i32, i32) {
    %c0_i32 = arith.constant 0 : i32
    %c0_i32_0 = arith.constant 0 : i32
    %c0_i32_1 = arith.constant 0 : i32
    return %c0_i32, %c0_i32_0 : i32, i32
  }
  func.func @transform_2(%arg0: i32) -> (i32, i32) {
    %c0_i32 = arith.constant 0 : i32
    %c0_i32_0 = arith.constant 0 : i32
    %c0_i32_1 = arith.constant 0 : i32
    return %c0_i32, %c0_i32_0 : i32, i32
  }
  func.func @transform_3(%arg0: i32) -> (i32, i32) {
    %c0_i32 = arith.constant 0 : i32
    %c0_i32_0 = arith.constant 0 : i32
    %c0_i32_1 = arith.constant 0 : i32
    return %c0_i32, %c0_i32_0 : i32, i32
  }
  func.func @transform_4(%arg0: i32) -> (i32, i32) {
    %c0_i32 = arith.constant 0 : i32
    %c0_i32_0 = arith.constant 0 : i32
    %c0_i32_1 = arith.constant 0 : i32
    return %c0_i32, %c0_i32_0 : i32, i32
  }
  func.func @transform_5(%arg0: i32) -> (i32, i32) {
    %c0_i32 = arith.constant 0 : i32
    %c0_i32_0 = arith.constant 0 : i32
    %c0_i32_1 = arith.constant 0 : i32
    return %c0_i32, %c0_i32_0 : i32, i32
  }
  func.func @transform_6(%arg0: i32) -> (i32, i32) {
    %c0_i32 = arith.constant 0 : i32
    %c0_i32_0 = arith.constant 0 : i32
    %c0_i32_1 = arith.constant 0 : i32
    return %c0_i32, %c0_i32_0 : i32, i32
  }
  func.func @transform_7(%arg0: i32) -> (i32, i32) {
    %c0_i32 = arith.constant 0 : i32
    %c0_i32_0 = arith.constant 0 : i32
    %c0_i32_1 = arith.constant 0 : i32
    return %c0_i32, %c0_i32_0 : i32, i32
  }
}

</mosaic_0001>

<llo_original>
// kernel: block_x_forward.1
$region0: #{block_x_forward.1}
  #allocation0 [shape = 'u32[]', space=smem, size = 0x4, offset = 0x4, fixed_abs, tag = 'smem constant byte address 0x4 - core index']
  #allocation1 [shape = 'u32[144,128]{1,0:T(1,128)}', space=vmem, size = 0x12000, scoped, tag = 'internal scratch']
  %s0 = inlined_call_operand.vmem [shape: f32[8,384], index: 0, kind: input, shape index: {}]
  %s1 = inlined_call_operand.vmem [shape: f32[8,128], index: 1, kind: input, shape index: {}]
  %s2 = inlined_call_operand.vmem [shape: f32[8,1], index: 2, kind: input, shape index: {}]
  %s3 = inlined_call_operand.vmem [shape: f32[8,1], index: 3, kind: input, shape index: {}]
  %s4 = inlined_call_operand.vmem [shape: bf16[8,72], index: 4, kind: input, shape index: {}]
  %s5 = inlined_call_operand.vmem [shape: f32[8,1], index: 5, kind: input, shape index: {}]
  %s6 = inlined_call_operand.vmem [shape: f32[8,384], index: 6, kind: output, shape index: {0}]
  %s7 = inlined_call_operand.vmem [shape: f32[8,128], index: 7, kind: output, shape index: {1}]
  %8 = xla_tuple %s6, %s7
  %s9 = sld [smem:[#allocation0]]
  $region42: #{block_x_forward.1} parent=0
    _
  %s11 = ssub.s32 1, %s9
  %s12 = scalar_select 0, %s11, %s9
  // Predicated region
  $region2: #{block_x_forward.1} parent=0 // pred_check
    _
  $region3: #{block_x_forward.1} parent=0 // pred_check_branch
    %14 = sbr.rel (0) target = $region5
  $region4: #{block_x_forward.1} parent=0 // pred_region
    _
  $region5: #{block_x_forward.1} parent=0 // pred_fallthru
    _
  // Predicated region
  $region6: #{block_x_forward.1} parent=0 // pred_check
    _
  $region7: #{block_x_forward.1} parent=0 // pred_check_branch
    %16 = sbr.rel (0) target = $region9
  $region8: #{block_x_forward.1} parent=0 // pred_region
    _
  $region9: #{block_x_forward.1} parent=0 // pred_fallthru
    _
  // Predicated region
  $region10: #{block_x_forward.1} parent=0 // pred_check
    _
  $region11: #{block_x_forward.1} parent=0 // pred_check_branch
    %18 = sbr.rel (0) target = $region13
  $region12: #{block_x_forward.1} parent=0 // pred_region
    _
  $region13: #{block_x_forward.1} parent=0 // pred_fallthru
    _
  // Predicated region
  $region14: #{block_x_forward.1} parent=0 // pred_check
    _
  $region15: #{block_x_forward.1} parent=0 // pred_check_branch
    %20 = sbr.rel (0) target = $region17
  $region16: #{block_x_forward.1} parent=0 // pred_region
    _
  $region17: #{block_x_forward.1} parent=0 // pred_fallthru
    _
  // Predicated region
  $region18: #{block_x_forward.1} parent=0 // pred_check
    _
  $region19: #{block_x_forward.1} parent=0 // pred_check_branch
    %22 = sbr.rel (0) target = $region21
  $region20: #{block_x_forward.1} parent=0 // pred_region
    _
  $region21: #{block_x_forward.1} parent=0 // pred_fallthru
    _
  // Predicated region
  $region22: #{block_x_forward.1} parent=0 // pred_check
    _
  $region23: #{block_x_forward.1} parent=0 // pred_check_branch
    %24 = sbr.rel (0) target = $region25
  $region24: #{block_x_forward.1} parent=0 // pred_region
    _
  $region25: #{block_x_forward.1} parent=0 // pred_fallthru
    _
  %v26 = vld [vmem:[%s0] sm:$0xff]
  %v27 = vld [vmem:[%s0 + $0x8] sm:$0xff]
  %v28 = vld [vmem:[%s0 + $0x10] sm:$0xff]
  %v29 = vld [vmem:[%s2] sm:$0xff]
  %31 = vset.pattern.permute.xlu0 0
  %32 = vperm.xlu0 %31, %v29
  %v33 = vpop.permute.xlu0 %32
  %v35 = vmul.f32 %v26, %v33
  %v36 = vmul.f32 %v27, %v33
  %v37 = vmul.f32 %v28, %v33
  %v38 = vld [vmem:[%s3] sm:$0xff]
  %40 = vset.pattern.permute.xlu0 0
  %41 = vperm.xlu0 %40, %v38
  %v42 = vpop.permute.xlu0 %41
  %v44 = vadd.f32 %v35, %v42
  %v45 = vadd.f32 %v36, %v42
  %v46 = vadd.f32 %v37, %v42
  %vm47 = vcmp.ge.f32.partialorder %v44, 0.0
  %vm48 = vcmp.ge.f32.partialorder %v45, 0.0
  %vm49 = vcmp.ge.f32.partialorder %v46, 0.0
  %v50 = vmul.f32 %v44, 0.01
  %v51 = vmul.f32 %v45, 0.01
  %v52 = vmul.f32 %v46, 0.01
  %v53 = vsel %vm47, %v44, %v50
  %v54 = vsel %vm48, %v45, %v51
  %v55 = vsel %vm49, %v46, %v52
  %v56 = vlaneseq
  %v57 = vand.u32 %v56, 127
  %v58 = vadd.s32 %v57, 128
  %v59 = vadd.s32 %v57, 256
  %v60 = vcvt.s32.f32 %v57
  %v61 = vcvt.s32.f32 %v58
  %v62 = vcvt.s32.f32 %v59
  %v63 = vadd.f32 %v60, 0.5
  %v64 = vadd.f32 %v61, 0.5
  %v65 = vadd.f32 %v62, 0.5
  %v66 = vmul.f32 %v63, 0.1
  %v67 = vmul.f32 %v64, 0.1
  %v68 = vmul.f32 %v65, 0.1
  %v69 = vfloor.f32 %v66
  %v70 = vfloor.f32 %v67
  %v71 = vfloor.f32 %v68
  %v72 = vmul.f32 %v69, 10.0
  %v73 = vmul.f32 %v70, 10.0
  %v74 = vmul.f32 %v71, 10.0
  %v75 = vsub.f32 %v60, %v72
  %v76 = vsub.f32 %v61, %v73
  %v77 = vsub.f32 %v62, %v74
  %v78 = vadd.f32 %v69, 0.5
  %v79 = vadd.f32 %v70, 0.5
  %v80 = vadd.f32 %v71, 0.5
  %v81 = vmul.f32 %v78, 0.055555556
  %v82 = vmul.f32 %v79, 0.055555556
  %v83 = vmul.f32 %v80, 0.055555556
  %v84 = vfloor.f32 %v81
  %v85 = vfloor.f32 %v82
  %v86 = vfloor.f32 %v83
  %v87 = vmul.f32 %v84, 18.0
  %v88 = vmul.f32 %v85, 18.0
  %v89 = vmul.f32 %v86, 18.0
  %v90 = vsub.f32 %v69, %v87
  %v91 = vsub.f32 %v70, %v88
  %v92 = vsub.f32 %v71, %v89
  %vm93 = vcmp.lt.f32.partialorder %v60, 360.0
  %vm94 = vcmp.lt.f32.partialorder %v61, 360.0
  %vm95 = vcmp.lt.f32.partialorder %v62, 360.0
  %vm96 = vcmp.ge.f32.partialorder %v75, 2.0
  %vm97 = vcmp.ge.f32.partialorder %v76, 2.0
  %vm98 = vcmp.ge.f32.partialorder %v77, 2.0
  %vm99 = vmand %vm93, %vm96
  %vm100 = vmand %vm94, %vm97
  %vm101 = vmand %vm95, %vm98
  %vm102 = vcmp.lt.f32.partialorder %v75, 10.0
  %vm103 = vcmp.lt.f32.partialorder %v76, 10.0
  %vm104 = vcmp.lt.f32.partialorder %v77, 10.0
  %vm105 = vmand %vm99, %vm102
  %vm106 = vmand %vm100, %vm103
  %vm107 = vmand %vm101, %vm104
  %vm108 = vcmp.ge.f32.partialorder %v90, 1.0
  %vm109 = vcmp.ge.f32.partialorder %v91, 1.0
  %vm110 = vcmp.ge.f32.partialorder %v92, 1.0
  %vm111 = vmand %vm105, %vm108
  %vm112 = vmand %vm106, %vm109
  %vm113 = vmand %vm107, %vm110
  %vm114 = vcmp.lt.f32.partialorder %v90, 17.0
  %vm115 = vcmp.lt.f32.partialorder %v91, 17.0
  %vm116 = vcmp.lt.f32.partialorder %v92, 17.0
  %vm117 = vmand %vm111, %vm114
  %vm118 = vmand %vm112, %vm115
  %vm119 = vmand %vm113, %vm116
  %v120 = vsel %vm117, 1, 0
  %v121 = vsel %vm118, 1, 0
  %v122 = vsel %vm119, 1, 0
  %vm123 = vcmp.eq.s32.totalorder %v120, 1
  %vm124 = vcmp.eq.s32.totalorder %v121, 1
  %vm125 = vcmp.eq.s32.totalorder %v122, 1
  %v126 = vsel %vm123, %v53, 0.0
  %v127 = vsel %vm124, %v54, 0.0
  %v128 = vsel %vm125, %v55, 0.0
  %v129 = vlaneseq
  %v130 = vshrl.u32 %v129, 7
  %v131 = vadd.s32 %v130, 8
  %v132 = vadd.s32 %v130, 16
  %v133 = vadd.s32 %v130, 24
  %v134 = vadd.s32 %v130, 32
  %v135 = vadd.s32 %v130, 40
  %v136 = vadd.s32 %v130, 48
  %v137 = vadd.s32 %v130, 56
  %v138 = vadd.s32 %v130, 64
  %v139 = vadd.s32 %v130, 72
  %v140 = vadd.s32 %v130, 80
  %v141 = vadd.s32 %v130, 88
  %v142 = vadd.s32 %v130, 96
  %v143 = vadd.s32 %v130, 104
  %v144 = vadd.s32 %v130, 112
  %v145 = vadd.s32 %v130, 120
  %v146 = vcvt.s32.f32 %v130
  %v147 = vcvt.s32.f32 %v131
  %v148 = vcvt.s32.f32 %v132
  %v149 = vcvt.s32.f32 %v133
  %v150 = vcvt.s32.f32 %v134
  %v151 = vcvt.s32.f32 %v135
  %v152 = vcvt.s32.f32 %v136
  %v153 = vcvt.s32.f32 %v137
  %v154 = vcvt.s32.f32 %v138
  %v155 = vcvt.s32.f32 %v139
  %v156 = vcvt.s32.f32 %v140
  %v157 = vcvt.s32.f32 %v141
  %v158 = vcvt.s32.f32 %v142
  %v159 = vcvt.s32.f32 %v143
  %v160 = vcvt.s32.f32 %v144
  %v161 = vcvt.s32.f32 %v145
  %v162 = vadd.f32 %v146, 0.5
  %v163 = vadd.f32 %v147, 0.5
  %v164 = vadd.f32 %v148, 0.5
  %v165 = vadd.f32 %v149, 0.5
  %v166 = vadd.f32 %v150, 0.5
  %v167 = vadd.f32 %v151, 0.5
  %v168 = vadd.f32 %v152, 0.5
  %v169 = vadd.f32 %v153, 0.5
  %v170 = vadd.f32 %v154, 0.5
  %v171 = vadd.f32 %v155, 0.5
  %v172 = vadd.f32 %v156, 0.5
  %v173 = vadd.f32 %v157, 0.5
  %v174 = vadd.f32 %v158, 0.5
  %v175 = vadd.f32 %v159, 0.5
  %v176 = vadd.f32 %v160, 0.5
  %v177 = vadd.f32 %v161, 0.5
  %v178 = vmul.f32 %v162, 0.5
  %v179 = vmul.f32 %v163, 0.5
  %v180 = vmul.f32 %v164, 0.5
  %v181 = vmul.f32 %v165, 0.5
  %v182 = vmul.f32 %v166, 0.5
  %v183 = vmul.f32 %v167, 0.5
  %v184 = vmul.f32 %v168, 0.5
  %v185 = vmul.f32 %v169, 0.5
  %v186 = vmul.f32 %v170, 0.5
  %v187 = vmul.f32 %v171, 0.5
  %v188 = vmul.f32 %v172, 0.5
  %v189 = vmul.f32 %v173, 0.5
  %v190 = vmul.f32 %v174, 0.5
  %v191 = vmul.f32 %v175, 0.5
  %v192 = vmul.f32 %v176, 0.5
  %v193 = vmul.f32 %v177, 0.5
  %v194 = vfloor.f32 %v178
  %v195 = vfloor.f32 %v179
  %v196 = vfloor.f32 %v180
  %v197 = vfloor.f32 %v181
  %v198 = vfloor.f32 %v182
  %v199 = vfloor.f32 %v183
  %v200 = vfloor.f32 %v184
  %v201 = vfloor.f32 %v185
  %v202 = vfloor.f32 %v186
  %v203 = vfloor.f32 %v187
  %v204 = vfloor.f32 %v188
  %v205 = vfloor.f32 %v189
  %v206 = vfloor.f32 %v190
  %v207 = vfloor.f32 %v191
  %v208 = vfloor.f32 %v192
  %v209 = vfloor.f32 %v193
  %v210 = vmul.f32 %v194, 2.0
  %v211 = vmul.f32 %v195, 2.0
  %v212 = vmul.f32 %v196, 2.0
  %v213 = vmul.f32 %v197, 2.0
  %v214 = vmul.f32 %v198, 2.0
  %v215 = vmul.f32 %v199, 2.0
  %v216 = vmul.f32 %v200, 2.0
  %v217 = vmul.f32 %v201, 2.0
  %v218 = vmul.f32 %v202, 2.0
  %v219 = vmul.f32 %v203, 2.0
  %v220 = vmul.f32 %v204, 2.0
  %v221 = vmul.f32 %v205, 2.0
  %v222 = vmul.f32 %v206, 2.0
  %v223 = vmul.f32 %v207, 2.0
  %v224 = vmul.f32 %v208, 2.0
  %v225 = vmul.f32 %v209, 2.0
  %v226 = vsub.f32 %v146, %v210
  %v227 = vsub.f32 %v147, %v211
  %v228 = vsub.f32 %v148, %v212
  %v229 = vsub.f32 %v149, %v213
  %v230 = vsub.f32 %v150, %v214
  %v231 = vsub.f32 %v151, %v215
  %v232 = vsub.f32 %v152, %v216
  %v233 = vsub.f32 %v153, %v217
  %v234 = vsub.f32 %v154, %v218
  %v235 = vsub.f32 %v155, %v219
  %v236 = vsub.f32 %v156, %v220
  %v237 = vsub.f32 %v157, %v221
  %v238 = vsub.f32 %v158, %v222
  %v239 = vsub.f32 %v159, %v223
  %v240 = vsub.f32 %v160, %v224
  %v241 = vsub.f32 %v161, %v225
  %v242 = vadd.f32 %v194, 0.5
  %v243 = vadd.f32 %v195, 0.5
  %v244 = vadd.f32 %v196, 0.5
  %v245 = vadd.f32 %v197, 0.5
  %v246 = vadd.f32 %v198, 0.5
  %v247 = vadd.f32 %v199, 0.5
  %v248 = vadd.f32 %v200, 0.5
  %v249 = vadd.f32 %v201, 0.5
  %v250 = vadd.f32 %v202, 0.5
  %v251 = vadd.f32 %v203, 0.5
  %v252 = vadd.f32 %v204, 0.5
  %v253 = vadd.f32 %v205, 0.5
  %v254 = vadd.f32 %v206, 0.5
  %v255 = vadd.f32 %v207, 0.5
  %v256 = vadd.f32 %v208, 0.5
  %v257 = vadd.f32 %v209, 0.5
  %v258 = vmul.f32 %v242, 0.0625
  %v259 = vmul.f32 %v243, 0.0625
  %v260 = vmul.f32 %v244, 0.0625
  %v261 = vmul.f32 %v245, 0.0625
  %v262 = vmul.f32 %v246, 0.0625
  %v263 = vmul.f32 %v247, 0.0625
  %v264 = vmul.f32 %v248, 0.0625
  %v265 = vmul.f32 %v249, 0.0625
  %v266 = vmul.f32 %v250, 0.0625
  %v267 = vmul.f32 %v251, 0.0625
  %v268 = vmul.f32 %v252, 0.0625
  %v269 = vmul.f32 %v253, 0.0625
  %v270 = vmul.f32 %v254, 0.0625
  %v271 = vmul.f32 %v255, 0.0625
  %v272 = vmul.f32 %v256, 0.0625
  %v273 = vmul.f32 %v257, 0.0625
  %v274 = vfloor.f32 %v258
  %v275 = vfloor.f32 %v259
  %v276 = vfloor.f32 %v260
  %v277 = vfloor.f32 %v261
  %v278 = vfloor.f32 %v262
  %v279 = vfloor.f32 %v263
  %v280 = vfloor.f32 %v264
  %v281 = vfloor.f32 %v265
  %v282 = vfloor.f32 %v266
  %v283 = vfloor.f32 %v267
  %v284 = vfloor.f32 %v268
  %v285 = vfloor.f32 %v269
  %v286 = vfloor.f32 %v270
  %v287 = vfloor.f32 %v271
  %v288 = vfloor.f32 %v272
  %v289 = vfloor.f32 %v273
  %v290 = vmul.f32 %v274, 16.0
  %v291 = vmul.f32 %v275, 16.0
  %v292 = vmul.f32 %v276, 16.0
  %v293 = vmul.f32 %v277, 16.0
  %v294 = vmul.f32 %v278, 16.0
  %v295 = vmul.f32 %v279, 16.0
  %v296 = vmul.f32 %v280, 16.0
  %v297 = vmul.f32 %v281, 16.0
  %v298 = vmul.f32 %v282, 16.0
  %v299 = vmul.f32 %v283, 16.0
  %v300 = vmul.f32 %v284, 16.0
  %v301 = vmul.f32 %v285, 16.0
  %v302 = vmul.f32 %v286, 16.0
  %v303 = vmul.f32 %v287, 16.0
  %v304 = vmul.f32 %v288, 16.0
  %v305 = vmul.f32 %v289, 16.0
  %v306 = vsub.f32 %v194, %v290
  %v307 = vsub.f32 %v195, %v291
  %v308 = vsub.f32 %v196, %v292
  %v309 = vsub.f32 %v197, %v293
  %v310 = vsub.f32 %v198, %v294
  %v311 = vsub.f32 %v199, %v295
  %v312 = vsub.f32 %v200, %v296
  %v313 = vsub.f32 %v201, %v297
  %v314 = vsub.f32 %v202, %v298
  %v315 = vsub.f32 %v203, %v299
  %v316 = vsub.f32 %v204, %v300
  %v317 = vsub.f32 %v205, %v301
  %v318 = vsub.f32 %v206, %v302
  %v319 = vsub.f32 %v207, %v303
  %v320 = vsub.f32 %v208, %v304
  %v321 = vsub.f32 %v209, %v305
  %v322 = vmul.f32 %v274, 180.0
  %v323 = vmul.f32 %v275, 180.0
  %v324 = vmul.f32 %v276, 180.0
  %v325 = vmul.f32 %v277, 180.0
  %v326 = vmul.f32 %v278, 180.0
  %v327 = vmul.f32 %v279, 180.0
  %v328 = vmul.f32 %v280, 180.0
  %v329 = vmul.f32 %v281, 180.0
  %v330 = vmul.f32 %v282, 180.0
  %v331 = vmul.f32 %v283, 180.0
  %v332 = vmul.f32 %v284, 180.0
  %v333 = vmul.f32 %v285, 180.0
  %v334 = vmul.f32 %v286, 180.0
  %v335 = vmul.f32 %v287, 180.0
  %v336 = vmul.f32 %v288, 180.0
  %v337 = vmul.f32 %v289, 180.0
  %v338 = vadd.f32 %v306, 1.0
  %v339 = vadd.f32 %v307, 1.0
  %v340 = vadd.f32 %v308, 1.0
  %v341 = vadd.f32 %v309, 1.0
  %v342 = vadd.f32 %v310, 1.0
  %v343 = vadd.f32 %v311, 1.0
  %v344 = vadd.f32 %v312, 1.0
  %v345 = vadd.f32 %v313, 1.0
  %v346 = vadd.f32 %v314, 1.0
  %v347 = vadd.f32 %v315, 1.0
  %v348 = vadd.f32 %v316, 1.0
  %v349 = vadd.f32 %v317, 1.0
  %v350 = vadd.f32 %v318, 1.0
  %v351 = vadd.f32 %v319, 1.0
  %v352 = vadd.f32 %v320, 1.0
  %v353 = vadd.f32 %v321, 1.0
  %v354 = vmul.f32 %v338, 10.0
  %v355 = vmul.f32 %v339, 10.0
  %v356 = vmul.f32 %v340, 10.0
  %v357 = vmul.f32 %v341, 10.0
  %v358 = vmul.f32 %v342, 10.0
  %v359 = vmul.f32 %v343, 10.0
  %v360 = vmul.f32 %v344, 10.0
  %v361 = vmul.f32 %v345, 10.0
  %v362 = vmul.f32 %v346, 10.0
  %v363 = vmul.f32 %v347, 10.0
  %v364 = vmul.f32 %v348, 10.0
  %v365 = vmul.f32 %v349, 10.0
  %v366 = vmul.f32 %v350, 10.0
  %v367 = vmul.f32 %v351, 10.0
  %v368 = vmul.f32 %v352, 10.0
  %v369 = vmul.f32 %v353, 10.0
  %v370 = vadd.f32 %v322, %v354
  %v371 = vadd.f32 %v323, %v355
  %v372 = vadd.f32 %v324, %v356
  %v373 = vadd.f32 %v325, %v357
  %v374 = vadd.f32 %v326, %v358
  %v375 = vadd.f32 %v327, %v359
  %v376 = vadd.f32 %v328, %v360
  %v377 = vadd.f32 %v329, %v361
  %v378 = vadd.f32 %v330, %v362
  %v379 = vadd.f32 %v331, %v363
  %v380 = vadd.f32 %v332, %v364
  %v381 = vadd.f32 %v333, %v365
  %v382 = vadd.f32 %v334, %v366
  %v383 = vadd.f32 %v335, %v367
  %v384 = vadd.f32 %v336, %v368
  %v385 = vadd.f32 %v337, %v369
  %v386 = vadd.f32 %v370, %v226
  %v387 = vadd.f32 %v371, %v227
  %v388 = vadd.f32 %v372, %v228
  %v389 = vadd.f32 %v373, %v229
  %v390 = vadd.f32 %v374, %v230
  %v391 = vadd.f32 %v375, %v231
  %v392 = vadd.f32 %v376, %v232
  %v393 = vadd.f32 %v377, %v233
  %v394 = vadd.f32 %v378, %v234
  %v395 = vadd.f32 %v379, %v235
  %v396 = vadd.f32 %v380, %v236
  %v397 = vadd.f32 %v381, %v237
  %v398 = vadd.f32 %v382, %v238
  %v399 = vadd.f32 %v383, %v239
  %v400 = vadd.f32 %v384, %v240
  %v401 = vadd.f32 %v385, %v241
  %vm402 = vcmp.eq.f32.partialorder %v60, %v386
  %vm403 = vcmp.eq.f32.partialorder %v61, %v386
  %vm404 = vcmp.eq.f32.partialorder %v62, %v386
  %vm405 = vcmp.eq.f32.partialorder %v60, %v387
  %vm406 = vcmp.eq.f32.partialorder %v61, %v387
  %vm407 = vcmp.eq.f32.partialorder %v62, %v387
  %vm408 = vcmp.eq.f32.partialorder %v60, %v388
  %vm409 = vcmp.eq.f32.partialorder %v61, %v388
  %vm410 = vcmp.eq.f32.partialorder %v62, %v388
  %vm411 = vcmp.eq.f32.partialorder %v60, %v389
  %vm412 = vcmp.eq.f32.partialorder %v61, %v389
  %vm413 = vcmp.eq.f32.partialorder %v62, %v389
  %vm414 = vcmp.eq.f32.partialorder %v60, %v390
  %vm415 = vcmp.eq.f32.partialorder %v61, %v390
  %vm416 = vcmp.eq.f32.partialorder %v62, %v390
  %vm417 = vcmp.eq.f32.partialorder %v60, %v391
  %vm418 = vcmp.eq.f32.partialorder %v61, %v391
  %vm419 = vcmp.eq.f32.partialorder %v62, %v391
  %vm420 = vcmp.eq.f32.partialorder %v60, %v392
  %vm421 = vcmp.eq.f32.partialorder %v61, %v392
  %vm422 = vcmp.eq.f32.partialorder %v62, %v392
  %vm423 = vcmp.eq.f32.partialorder %v60, %v393
  %vm424 = vcmp.eq.f32.partialorder %v61, %v393
  %vm425 = vcmp.eq.f32.partialorder %v62, %v393
  %vm426 = vcmp.eq.f32.partialorder %v60, %v394
  %vm427 = vcmp.eq.f32.partialorder %v61, %v394
  %vm428 = vcmp.eq.f32.partialorder %v62, %v394
  %vm429 = vcmp.eq.f32.partialorder %v60, %v395
  %vm430 = vcmp.eq.f32.partialorder %v61, %v395
  %vm431 = vcmp.eq.f32.partialorder %v62, %v395
  %vm432 = vcmp.eq.f32.partialorder %v60, %v396
  %vm433 = vcmp.eq.f32.partialorder %v61, %v396
  %vm434 = vcmp.eq.f32.partialorder %v62, %v396
  %vm435 = vcmp.eq.f32.partialorder %v60, %v397
  %vm436 = vcmp.eq.f32.partialorder %v61, %v397
  %vm437 = vcmp.eq.f32.partialorder %v62, %v397
  %vm438 = vcmp.eq.f32.partialorder %v60, %v398
  %vm439 = vcmp.eq.f32.partialorder %v61, %v398
  %vm440 = vcmp.eq.f32.partialorder %v62, %v398
  %vm441 = vcmp.eq.f32.partialorder %v60, %v399
  %vm442 = vcmp.eq.f32.partialorder %v61, %v399
  %vm443 = vcmp.eq.f32.partialorder %v62, %v399
  %vm444 = vcmp.eq.f32.partialorder %v60, %v400
  %vm445 = vcmp.eq.f32.partialorder %v61, %v400
  %vm446 = vcmp.eq.f32.partialorder %v62, %v400
  %vm447 = vcmp.eq.f32.partialorder %v60, %v401
  %vm448 = vcmp.eq.f32.partialorder %v61, %v401
  %vm449 = vcmp.eq.f32.partialorder %v62, %v401
  %vm450 = vcmp.lt.f32.partialorder %v146, 64.0
  %vm451 = vcmp.lt.f32.partialorder %v147, 64.0
  %vm452 = vcmp.lt.f32.partialorder %v148, 64.0
  %vm453 = vcmp.lt.f32.partialorder %v149, 64.0
  %vm454 = vcmp.lt.f32.partialorder %v150, 64.0
  %vm455 = vcmp.lt.f32.partialorder %v151, 64.0
  %vm456 = vcmp.lt.f32.partialorder %v152, 64.0
  %vm457 = vcmp.lt.f32.partialorder %v153, 64.0
  %vm458 = vcmp.lt.f32.partialorder %v154, 64.0
  %vm459 = vcmp.lt.f32.partialorder %v155, 64.0
  %vm460 = vcmp.lt.f32.partialorder %v156, 64.0
  %vm461 = vcmp.lt.f32.partialorder %v157, 64.0
  %vm462 = vcmp.lt.f32.partialorder %v158, 64.0
  %vm463 = vcmp.lt.f32.partialorder %v159, 64.0
  %vm464 = vcmp.lt.f32.partialorder %v160, 64.0
  %vm465 = vcmp.lt.f32.partialorder %v161, 64.0
  %v466 = vsel %vm450, 1, 0
  %v467 = vsel %vm451, 1, 0
  %v468 = vsel %vm452, 1, 0
  %v469 = vsel %vm453, 1, 0
  %v470 = vsel %vm454, 1, 0
  %v471 = vsel %vm455, 1, 0
  %v472 = vsel %vm456, 1, 0
  %v473 = vsel %vm457, 1, 0
  %v474 = vsel %vm458, 1, 0
  %v475 = vsel %vm459, 1, 0
  %v476 = vsel %vm460, 1, 0
  %v477 = vsel %vm461, 1, 0
  %v478 = vsel %vm462, 1, 0
  %v479 = vsel %vm463, 1, 0
  %v480 = vsel %vm464, 1, 0
  %v481 = vsel %vm465, 1, 0
  %vm482 = vcmp.eq.s32.totalorder %v466, 1
  %vm483 = vcmp.eq.s32.totalorder %v467, 1
  %vm484 = vcmp.eq.s32.totalorder %v468, 1
  %vm485 = vcmp.eq.s32.totalorder %v469, 1
  %vm486 = vcmp.eq.s32.totalorder %v470, 1
  %vm487 = vcmp.eq.s32.totalorder %v471, 1
  %vm488 = vcmp.eq.s32.totalorder %v472, 1
  %vm489 = vcmp.eq.s32.totalorder %v473, 1
  %vm490 = vcmp.eq.s32.totalorder %v474, 1
  %vm491 = vcmp.eq.s32.totalorder %v475, 1
  %vm492 = vcmp.eq.s32.totalorder %v476, 1
  %vm493 = vcmp.eq.s32.totalorder %v477, 1
  %vm494 = vcmp.eq.s32.totalorder %v478, 1
  %vm495 = vcmp.eq.s32.totalorder %v479, 1
  %vm496 = vcmp.eq.s32.totalorder %v480, 1
  %vm497 = vcmp.eq.s32.totalorder %v481, 1
  %vm498 = vmand %vm402, %vm482
  %vm499 = vmand %vm403, %vm482
  %vm500 = vmand %vm404, %vm482
  %vm501 = vmand %vm405, %vm483
  %vm502 = vmand %vm406, %vm483
  %vm503 = vmand %vm407, %vm483
  %vm504 = vmand %vm408, %vm484
  %vm505 = vmand %vm409, %vm484
  %vm506 = vmand %vm410, %vm484
  %vm507 = vmand %vm411, %vm485
  %vm508 = vmand %vm412, %vm485
  %vm509 = vmand %vm413, %vm485
  %vm510 = vmand %vm414, %vm486
  %vm511 = vmand %vm415, %vm486
  %vm512 = vmand %vm416, %vm486
  %vm513 = vmand %vm417, %vm487
  %vm514 = vmand %vm418, %vm487
  %vm515 = vmand %vm419, %vm487
  %vm516 = vmand %vm420, %vm488
  %vm517 = vmand %vm421, %vm488
  %vm518 = vmand %vm422, %vm488
  %vm519 = vmand %vm423, %vm489
  %vm520 = vmand %vm424, %vm489
  %vm521 = vmand %vm425, %vm489
  %vm522 = vmand %vm426, %vm490
  %vm523 = vmand %vm427, %vm490
  %vm524 = vmand %vm428, %vm490
  %vm525 = vmand %vm429, %vm491
  %vm526 = vmand %vm430, %vm491
  %vm527 = vmand %vm431, %vm491
  %vm528 = vmand %vm432, %vm492
  %vm529 = vmand %vm433, %vm492
  %vm530 = vmand %vm434, %vm492
  %vm531 = vmand %vm435, %vm493
  %vm532 = vmand %vm436, %vm493
  %vm533 = vmand %vm437, %vm493
  %vm534 = vmand %vm438, %vm494
  %vm535 = vmand %vm439, %vm494
  %vm536 = vmand %vm440, %vm494
  %vm537 = vmand %vm441, %vm495
  %vm538 = vmand %vm442, %vm495
  %vm539 = vmand %vm443, %vm495
  %vm540 = vmand %vm444, %vm496
  %vm541 = vmand %vm445, %vm496
  %vm542 = vmand %vm446, %vm496
  %vm543 = vmand %vm447, %vm497
  %vm544 = vmand %vm448, %vm497
  %vm545 = vmand %vm449, %vm497
  %v546 = vsel %vm498, 1.0, 0.0
  %v547 = vsel %vm499, 1.0, 0.0
  %v548 = vsel %vm500, 1.0, 0.0
  %v549 = vsel %vm501, 1.0, 0.0
  %v550 = vsel %vm502, 1.0, 0.0
  %v551 = vsel %vm503, 1.0, 0.0
  %v552 = vsel %vm504, 1.0, 0.0
  %v553 = vsel %vm505, 1.0, 0.0
  %v554 = vsel %vm506, 1.0, 0.0
  %v555 = vsel %vm507, 1.0, 0.0
  %v556 = vsel %vm508, 1.0, 0.0
  %v557 = vsel %vm509, 1.0, 0.0
  %v558 = vsel %vm510, 1.0, 0.0
  %v559 = vsel %vm511, 1.0, 0.0
  %v560 = vsel %vm512, 1.0, 0.0
  %v561 = vsel %vm513, 1.0, 0.0
  %v562 = vsel %vm514, 1.0, 0.0
  %v563 = vsel %vm515, 1.0, 0.0
  %v564 = vsel %vm516, 1.0, 0.0
  %v565 = vsel %vm517, 1.0, 0.0
  %v566 = vsel %vm518, 1.0, 0.0
  %v567 = vsel %vm519, 1.0, 0.0
  %v568 = vsel %vm520, 1.0, 0.0
  %v569 = vsel %vm521, 1.0, 0.0
  %v570 = vsel %vm522, 1.0, 0.0
  %v571 = vsel %vm523, 1.0, 0.0
  %v572 = vsel %vm524, 1.0, 0.0
  %v573 = vsel %vm525, 1.0, 0.0
  %v574 = vsel %vm526, 1.0, 0.0
  %v575 = vsel %vm527, 1.0, 0.0
  %v576 = vsel %vm528, 1.0, 0.0
  %v577 = vsel %vm529, 1.0, 0.0
  %v578 = vsel %vm530, 1.0, 0.0
  %v579 = vsel %vm531, 1.0, 0.0
  %v580 = vsel %vm532, 1.0, 0.0
  %v581 = vsel %vm533, 1.0, 0.0
  %v582 = vsel %vm534, 1.0, 0.0
  %v583 = vsel %vm535, 1.0, 0.0
  %v584 = vsel %vm536, 1.0, 0.0
  %v585 = vsel %vm537, 1.0, 0.0
  %v586 = vsel %vm538, 1.0, 0.0
  %v587 = vsel %vm539, 1.0, 0.0
  %v588 = vsel %vm540, 1.0, 0.0
  %v589 = vsel %vm541, 1.0, 0.0
  %v590 = vsel %vm542, 1.0, 0.0
  %v591 = vsel %vm543, 1.0, 0.0
  %v592 = vsel %vm544, 1.0, 0.0
  %v593 = vsel %vm545, 1.0, 0.0
  %v594 = vld [vmem:[%s1] sm:$0xff]
  %595 = vmatprep.subr.mxu0 %v547
  %596 = vmatpush1.msra.mxu0 %v546
  %597 = vmatprep.subr.mxu0 %v550
  %598 = vmatpush1.msra.mxu0 %v549
  %599 = vmatprep.subr.mxu0 %v553
  %600 = vmatpush1.msra.mxu0 %v552
  %601 = vmatprep.subr.mxu0 %v556
  %602 = vmatpush1.msra.mxu0 %v555
  %603 = vmatprep.subr.mxu0 %v559
  %604 = vmatpush1.msra.mxu0 %v558
  %605 = vmatprep.subr.mxu0 %v562
  %606 = vmatpush1.msra.mxu0 %v561
  %607 = vmatprep.subr.mxu0 %v565
  %608 = vmatpush1.msra.mxu0 %v564
  %609 = vmatprep.subr.mxu0 %v568
  %610 = vmatpush1.msra.mxu0 %v567
  %611 = vmatprep.subr.mxu0 %v571
  %612 = vmatpush1.msra.mxu0 %v570
  %613 = vmatprep.subr.mxu0 %v574
  %614 = vmatpush1.msra.mxu0 %v573
  %615 = vmatprep.subr.mxu0 %v577
  %616 = vmatpush1.msra.mxu0 %v576
  %617 = vmatprep.subr.mxu0 %v580
  %618 = vmatpush1.msra.mxu0 %v579
  %619 = vmatprep.subr.mxu0 %v583
  %620 = vmatpush1.msra.mxu0 %v582
  %621 = vmatprep.subr.mxu0 %v586
  %622 = vmatpush1.msra.mxu0 %v585
  %623 = vmatprep.subr.mxu0 %v589
  %624 = vmatpush1.msra.mxu0 %v588
  %625 = vmatprep.subr.mxu0 %v592
  %626 = vmatpush1.msra.mxu0 %v591
  %627 = vmatprep.subr.mxu0 0.0
  %628 = vmatpush1.msra.mxu0 0.0
  %629 = vmatprep.subr.mxu0 0.0
  %630 = vmatpush1.msra.mxu0 0.0
  %631 = vmatprep.subr.mxu0 0.0
  %632 = vmatpush1.msra.mxu0 0.0
  %633 = vmatprep.subr.mxu0 0.0
  %634 = vmatpush1.msra.mxu0 0.0
  %635 = vmatprep.subr.mxu0 0.0
  %636 = vmatpush1.msra.mxu0 0.0
  %637 = vmatprep.subr.mxu0 0.0
  %638 = vmatpush1.msra.mxu0 0.0
  %639 = vmatprep.subr.mxu0 0.0
  %640 = vmatpush1.msra.mxu0 0.0
  %641 = vmatprep.subr.mxu0 0.0
  %642 = vmatpush1.msra.mxu0 0.0
  %643 = vmatprep.subr.mxu0 0.0
  %644 = vmatpush1.msra.mxu0 0.0
  %645 = vmatprep.subr.mxu0 0.0
  %646 = vmatpush1.msra.mxu0 0.0
  %647 = vmatprep.subr.mxu0 0.0
  %648 = vmatpush1.msra.mxu0 0.0
  %649 = vmatprep.subr.mxu0 0.0
  %650 = vmatpush1.msra.mxu0 0.0
  %651 = vmatprep.subr.mxu0 0.0
  %652 = vmatpush1.msra.mxu0 0.0
  %653 = vmatprep.subr.mxu0 0.0
  %654 = vmatpush1.msra.mxu0 0.0
  %655 = vmatprep.subr.mxu0 0.0
  %656 = vmatpush1.msra.mxu0 0.0
  %657 = vmatprep.subr.mxu0 0.0
  %658 = vmatpush1.msra.mxu0 0.0
  %659 = vmatprep.mubr.f32.mxu0 0.0
  %660 = vmatmul.mubr.f32.gmra.mrb[0].mxu0 %v594
  %v661 = vpop.f32.mrb[0].mxu0
  %v662 = vadd.f32 0.0, %v661
  %v663 = vpop.f32.mrb[0].mxu0
  %v664 = vadd.f32 0.0, %v663
  %665 = vdwg.mxu0
  %666 = vmatprep.subr.mxu0 0.0
  %667 = vmatpush1.msra.mxu0 %v548
  %668 = vmatprep.subr.mxu0 0.0
  %669 = vmatpush1.msra.mxu0 %v551
  %670 = vmatprep.subr.mxu0 0.0
  %671 = vmatpush1.msra.mxu0 %v554
  %672 = vmatprep.subr.mxu0 0.0
  %673 = vmatpush1.msra.mxu0 %v557
  %674 = vmatprep.subr.mxu0 0.0
  %675 = vmatpush1.msra.mxu0 %v560
  %676 = vmatprep.subr.mxu0 0.0
  %677 = vmatpush1.msra.mxu0 %v563
  %678 = vmatprep.subr.mxu0 0.0
  %679 = vmatpush1.msra.mxu0 %v566
  %680 = vmatprep.subr.mxu0 0.0
  %681 = vmatpush1.msra.mxu0 %v569
  %682 = vmatprep.subr.mxu0 0.0
  %683 = vmatpush1.msra.mxu0 %v572
  %684 = vmatprep.subr.mxu0 0.0
  %685 = vmatpush1.msra.mxu0 %v575
  %686 = vmatprep.subr.mxu0 0.0
  %687 = vmatpush1.msra.mxu0 %v578
  %688 = vmatprep.subr.mxu0 0.0
  %689 = vmatpush1.msra.mxu0 %v581
  %690 = vmatprep.subr.mxu0 0.0
  %691 = vmatpush1.msra.mxu0 %v584
  %692 = vmatprep.subr.mxu0 0.0
  %693 = vmatpush1.msra.mxu0 %v587
  %694 = vmatprep.subr.mxu0 0.0
  %695 = vmatpush1.msra.mxu0 %v590
  %696 = vmatprep.subr.mxu0 0.0
  %697 = vmatpush1.msra.mxu0 %v593
  %698 = vmatprep.subr.mxu0 0.0
  %699 = vmatpush1.msra.mxu0 0.0
  %700 = vmatprep.subr.mxu0 0.0
  %701 = vmatpush1.msra.mxu0 0.0
  %702 = vmatprep.subr.mxu0 0.0
  %703 = vmatpush1.msra.mxu0 0.0
  %704 = vmatprep.subr.mxu0 0.0
  %705 = vmatpush1.msra.mxu0 0.0
  %706 = vmatprep.subr.mxu0 0.0
  %707 = vmatpush1.msra.mxu0 0.0
  %708 = vmatprep.subr.mxu0 0.0
  %709 = vmatpush1.msra.mxu0 0.0
  %710 = vmatprep.subr.mxu0 0.0
  %711 = vmatpush1.msra.mxu0 0.0
  %712 = vmatprep.subr.mxu0 0.0
  %713 = vmatpush1.msra.mxu0 0.0
  %714 = vmatprep.subr.mxu0 0.0
  %715 = vmatpush1.msra.mxu0 0.0
  %716 = vmatprep.subr.mxu0 0.0
  %717 = vmatpush1.msra.mxu0 0.0
  %718 = vmatprep.subr.mxu0 0.0
  %719 = vmatpush1.msra.mxu0 0.0
  %720 = vmatprep.subr.mxu0 0.0
  %721 = vmatpush1.msra.mxu0 0.0
  %722 = vmatprep.subr.mxu0 0.0
  %723 = vmatpush1.msra.mxu0 0.0
  %724 = vmatprep.subr.mxu0 0.0
  %725 = vmatpush1.msra.mxu0 0.0
  %726 = vmatprep.subr.mxu0 0.0
  %727 = vmatpush1.msra.mxu0 0.0
  %728 = vmatprep.subr.mxu0 0.0
  %729 = vmatpush1.msra.mxu0 0.0
  %730 = vmatprep.mubr.f32.mxu0 0.0
  %731 = vmatmul.mubr.f32.gmra.mrb[0].mxu0 %v594
  %v732 = vpop.f32.mrb[0].mxu0
  %v733 = vadd.f32 0.0, %v732
  %v734 = vpop.f32.mrb[0].mxu0
  %735 = vdwg.mxu0
  %v736 = vadd.f32 %v126, %v662
  %v737 = vadd.f32 %v127, %v664
  %v738 = vadd.f32 %v128, %v733
  %v739 = vmul.f32 %v63, 0.5
  %v740 = vfloor.f32 %v739
  %v741 = vmul.f32 %v740, 2.0
  %v742 = vsub.f32 %v60, %v741
  %v743 = vadd.f32 %v740, 0.5
  %v744 = vmul.f32 %v743, 0.0625
  %v745 = vfloor.f32 %v744
  %v746 = vmul.f32 %v745, 16.0
  %v747 = vsub.f32 %v740, %v746
  %v748 = vmul.f32 %v745, 180.0
  %v749 = vadd.f32 %v747, 1.0
  %v750 = vmul.f32 %v749, 10.0
  %v751 = vadd.f32 %v748, %v750
  %v752 = vadd.f32 %v751, 8.0
  %v753 = vadd.f32 %v752, %v742
  %v754 = vadd.s32 %v130, 128
  %v755 = vadd.s32 %v130, 136
  %v756 = vadd.s32 %v130, 144
  %v757 = vadd.s32 %v130, 152
  %v758 = vadd.s32 %v130, 160
  %v759 = vadd.s32 %v130, 168
  %v760 = vadd.s32 %v130, 176
  %v761 = vadd.s32 %v130, 184
  %v762 = vadd.s32 %v130, 192
  %v763 = vadd.s32 %v130, 200
  %v764 = vadd.s32 %v130, 208
  %v765 = vadd.s32 %v130, 216
  %v766 = vadd.s32 %v130, 224
  %v767 = vadd.s32 %v130, 232
  %v768 = vadd.s32 %v130, 240
  %v769 = vadd.s32 %v130, 248
  %v770 = vadd.s32 %v130, 256
  %v771 = vadd.s32 %v130, 264
  %v772 = vadd.s32 %v130, 272
  %v773 = vadd.s32 %v130, 280
  %v774 = vadd.s32 %v130, 288
  %v775 = vadd.s32 %v130, 296
  %v776 = vadd.s32 %v130, 304
  %v777 = vadd.s32 %v130, 312
  %v778 = vadd.s32 %v130, 320
  %v779 = vadd.s32 %v130, 328
  %v780 = vadd.s32 %v130, 336
  %v781 = vadd.s32 %v130, 344
  %v782 = vadd.s32 %v130, 352
  %v783 = vadd.s32 %v130, 360
  %v784 = vadd.s32 %v130, 368
  %v785 = vadd.s32 %v130, 376
  %v786 = vcvt.s32.f32 %v754
  %v787 = vcvt.s32.f32 %v755
  %v788 = vcvt.s32.f32 %v756
  %v789 = vcvt.s32.f32 %v757
  %v790 = vcvt.s32.f32 %v758
  %v791 = vcvt.s32.f32 %v759
  %v792 = vcvt.s32.f32 %v760
  %v793 = vcvt.s32.f32 %v761
  %v794 = vcvt.s32.f32 %v762
  %v795 = vcvt.s32.f32 %v763
  %v796 = vcvt.s32.f32 %v764
  %v797 = vcvt.s32.f32 %v765
  %v798 = vcvt.s32.f32 %v766
  %v799 = vcvt.s32.f32 %v767
  %v800 = vcvt.s32.f32 %v768
  %v801 = vcvt.s32.f32 %v769
  %v802 = vcvt.s32.f32 %v770
  %v803 = vcvt.s32.f32 %v771
  %v804 = vcvt.s32.f32 %v772
  %v805 = vcvt.s32.f32 %v773
  %v806 = vcvt.s32.f32 %v774
  %v807 = vcvt.s32.f32 %v775
  %v808 = vcvt.s32.f32 %v776
  %v809 = vcvt.s32.f32 %v777
  %v810 = vcvt.s32.f32 %v778
  %v811 = vcvt.s32.f32 %v779
  %v812 = vcvt.s32.f32 %v780
  %v813 = vcvt.s32.f32 %v781
  %v814 = vcvt.s32.f32 %v782
  %v815 = vcvt.s32.f32 %v783
  %v816 = vcvt.s32.f32 %v784
  %v817 = vcvt.s32.f32 %v785
  %vm818 = vcmp.eq.f32.partialorder %v146, %v753
  %vm819 = vcmp.eq.f32.partialorder %v147, %v753
  %vm820 = vcmp.eq.f32.partialorder %v148, %v753
  %vm821 = vcmp.eq.f32.partialorder %v149, %v753
  %vm822 = vcmp.eq.f32.partialorder %v150, %v753
  %vm823 = vcmp.eq.f32.partialorder %v151, %v753
  %vm824 = vcmp.eq.f32.partialorder %v152, %v753
  %vm825 = vcmp.eq.f32.partialorder %v153, %v753
  %vm826 = vcmp.eq.f32.partialorder %v154, %v753
  %vm827 = vcmp.eq.f32.partialorder %v155, %v753
  %vm828 = vcmp.eq.f32.partialorder %v156, %v753
  %vm829 = vcmp.eq.f32.partialorder %v157, %v753
  %vm830 = vcmp.eq.f32.partialorder %v158, %v753
  %vm831 = vcmp.eq.f32.partialorder %v159, %v753
  %vm832 = vcmp.eq.f32.partialorder %v160, %v753
  %vm833 = vcmp.eq.f32.partialorder %v161, %v753
  %vm834 = vcmp.eq.f32.partialorder %v786, %v753
  %vm835 = vcmp.eq.f32.partialorder %v787, %v753
  %vm836 = vcmp.eq.f32.partialorder %v788, %v753
  %vm837 = vcmp.eq.f32.partialorder %v789, %v753
  %vm838 = vcmp.eq.f32.partialorder %v790, %v753
  %vm839 = vcmp.eq.f32.partialorder %v791, %v753
  %vm840 = vcmp.eq.f32.partialorder %v792, %v753
  %vm841 = vcmp.eq.f32.partialorder %v793, %v753
  %vm842 = vcmp.eq.f32.partialorder %v794, %v753
  %vm843 = vcmp.eq.f32.partialorder %v795, %v753
  %vm844 = vcmp.eq.f32.partialorder %v796, %v753
  %vm845 = vcmp.eq.f32.partialorder %v797, %v753
  %vm846 = vcmp.eq.f32.partialorder %v798, %v753
  %vm847 = vcmp.eq.f32.partialorder %v799, %v753
  %vm848 = vcmp.eq.f32.partialorder %v800, %v753
  %vm849 = vcmp.eq.f32.partialorder %v801, %v753
  %vm850 = vcmp.eq.f32.partialorder %v802, %v753
  %vm851 = vcmp.eq.f32.partialorder %v803, %v753
  %vm852 = vcmp.eq.f32.partialorder %v804, %v753
  %vm853 = vcmp.eq.f32.partialorder %v805, %v753
  %vm854 = vcmp.eq.f32.partialorder %v806, %v753
  %vm855 = vcmp.eq.f32.partialorder %v807, %v753
  %vm856 = vcmp.eq.f32.partialorder %v808, %v753
  %vm857 = vcmp.eq.f32.partialorder %v809, %v753
  %vm858 = vcmp.eq.f32.partialorder %v810, %v753
  %vm859 = vcmp.eq.f32.partialorder %v811, %v753
  %vm860 = vcmp.eq.f32.partialorder %v812, %v753
  %vm861 = vcmp.eq.f32.partialorder %v813, %v753
  %vm862 = vcmp.eq.f32.partialorder %v814, %v753
  %vm863 = vcmp.eq.f32.partialorder %v815, %v753
  %vm864 = vcmp.eq.f32.partialorder %v816, %v753
  %vm865 = vcmp.eq.f32.partialorder %v817, %v753
  %vm866 = vcmp.lt.f32.partialorder %v60, 64.0
  %v867 = vsel %vm866, 1, 0
  %vm868 = vcmp.eq.s32.totalorder %v867, 1
  %vm869 = vmand %vm818, %vm868
  %vm870 = vmand %vm819, %vm868
  %vm871 = vmand %vm820, %vm868
  %vm872 = vmand %vm821, %vm868
  %vm873 = vmand %vm822, %vm868
  %vm874 = vmand %vm823, %vm868
  %vm875 = vmand %vm824, %vm868
  %vm876 = vmand %vm825, %vm868
  %vm877 = vmand %vm826, %vm868
  %vm878 = vmand %vm827, %vm868
  %vm879 = vmand %vm828, %vm868
  %vm880 = vmand %vm829, %vm868
  %vm881 = vmand %vm830, %vm868
  %vm882 = vmand %vm831, %vm868
  %vm883 = vmand %vm832, %vm868
  %vm884 = vmand %vm833, %vm868
  %vm885 = vmand %vm834, %vm868
  %vm886 = vmand %vm835, %vm868
  %vm887 = vmand %vm836, %vm868
  %vm888 = vmand %vm837, %vm868
  %vm889 = vmand %vm838, %vm868
  %vm890 = vmand %vm839, %vm868
  %vm891 = vmand %vm840, %vm868
  %vm892 = vmand %vm841, %vm868
  %vm893 = vmand %vm842, %vm868
  %vm894 = vmand %vm843, %vm868
  %vm895 = vmand %vm844, %vm868
  %vm896 = vmand %vm845, %vm868
  %vm897 = vmand %vm846, %vm868
  %vm898 = vmand %vm847, %vm868
  %vm899 = vmand %vm848, %vm868
  %vm900 = vmand %vm849, %vm868
  %vm901 = vmand %vm850, %vm868
  %vm902 = vmand %vm851, %vm868
  %vm903 = vmand %vm852, %vm868
  %vm904 = vmand %vm853, %vm868
  %vm905 = vmand %vm854, %vm868
  %vm906 = vmand %vm855, %vm868
  %vm907 = vmand %vm856, %vm868
  %vm908 = vmand %vm857, %vm868
  %vm909 = vmand %vm858, %vm868
  %vm910 = vmand %vm859, %vm868
  %vm911 = vmand %vm860, %vm868
  %vm912 = vmand %vm861, %vm868
  %vm913 = vmand %vm862, %vm868
  %vm914 = vmand %vm863, %vm868
  %vm915 = vmand %vm864, %vm868
  %vm916 = vmand %vm865, %vm868
  %v917 = vsel %vm869, 1.0, 0.0
  %v918 = vsel %vm870, 1.0, 0.0
  %v919 = vsel %vm871, 1.0, 0.0
  %v920 = vsel %vm872, 1.0, 0.0
  %v921 = vsel %vm873, 1.0, 0.0
  %v922 = vsel %vm874, 1.0, 0.0
  %v923 = vsel %vm875, 1.0, 0.0
  %v924 = vsel %vm876, 1.0, 0.0
  %v925 = vsel %vm877, 1.0, 0.0
  %v926 = vsel %vm878, 1.0, 0.0
  %v927 = vsel %vm879, 1.0, 0.0
  %v928 = vsel %vm880, 1.0, 0.0
  %v929 = vsel %vm881, 1.0, 0.0
  %v930 = vsel %vm882, 1.0, 0.0
  %v931 = vsel %vm883, 1.0, 0.0
  %v932 = vsel %vm884, 1.0, 0.0
  %v933 = vsel %vm885, 1.0, 0.0
  %v934 = vsel %vm886, 1.0, 0.0
  %v935 = vsel %vm887, 1.0, 0.0
  %v936 = vsel %vm888, 1.0, 0.0
  %v937 = vsel %vm889, 1.0, 0.0
  %v938 = vsel %vm890, 1.0, 0.0
  %v939 = vsel %vm891, 1.0, 0.0
  %v940 = vsel %vm892, 1.0, 0.0
  %v941 = vsel %vm893, 1.0, 0.0
  %v942 = vsel %vm894, 1.0, 0.0
  %v943 = vsel %vm895, 1.0, 0.0
  %v944 = vsel %vm896, 1.0, 0.0
  %v945 = vsel %vm897, 1.0, 0.0
  %v946 = vsel %vm898, 1.0, 0.0
  %v947 = vsel %vm899, 1.0, 0.0
  %v948 = vsel %vm900, 1.0, 0.0
  %v949 = vsel %vm901, 1.0, 0.0
  %v950 = vsel %vm902, 1.0, 0.0
  %v951 = vsel %vm903, 1.0, 0.0
  %v952 = vsel %vm904, 1.0, 0.0
  %v953 = vsel %vm905, 1.0, 0.0
  %v954 = vsel %vm906, 1.0, 0.0
  %v955 = vsel %vm907, 1.0, 0.0
  %v956 = vsel %vm908, 1.0, 0.0
  %v957 = vsel %vm909, 1.0, 0.0
  %v958 = vsel %vm910, 1.0, 0.0
  %v959 = vsel %vm911, 1.0, 0.0
  %v960 = vsel %vm912, 1.0, 0.0
  %v961 = vsel %vm913, 1.0, 0.0
  %v962 = vsel %vm914, 1.0, 0.0
  %v963 = vsel %vm915, 1.0, 0.0
  %v964 = vsel %vm916, 1.0, 0.0
  %965 = vmatprep.subr.mxu0 0.0
  %966 = vmatpush1.msra.mxu0 %v917
  %967 = vmatprep.subr.mxu0 0.0
  %968 = vmatpush1.msra.mxu0 %v918
  %969 = vmatprep.subr.mxu0 0.0
  %970 = vmatpush1.msra.mxu0 %v919
  %971 = vmatprep.subr.mxu0 0.0
  %972 = vmatpush1.msra.mxu0 %v920
  %973 = vmatprep.subr.mxu0 0.0
  %974 = vmatpush1.msra.mxu0 %v921
  %975 = vmatprep.subr.mxu0 0.0
  %976 = vmatpush1.msra.mxu0 %v922
  %977 = vmatprep.subr.mxu0 0.0
  %978 = vmatpush1.msra.mxu0 %v923
  %979 = vmatprep.subr.mxu0 0.0
  %980 = vmatpush1.msra.mxu0 %v924
  %981 = vmatprep.subr.mxu0 0.0
  %982 = vmatpush1.msra.mxu0 %v925
  %983 = vmatprep.subr.mxu0 0.0
  %984 = vmatpush1.msra.mxu0 %v926
  %985 = vmatprep.subr.mxu0 0.0
  %986 = vmatpush1.msra.mxu0 %v927
  %987 = vmatprep.subr.mxu0 0.0
  %988 = vmatpush1.msra.mxu0 %v928
  %989 = vmatprep.subr.mxu0 0.0
  %990 = vmatpush1.msra.mxu0 %v929
  %991 = vmatprep.subr.mxu0 0.0
  %992 = vmatpush1.msra.mxu0 %v930
  %993 = vmatprep.subr.mxu0 0.0
  %994 = vmatpush1.msra.mxu0 %v931
  %995 = vmatprep.subr.mxu0 0.0
  %996 = vmatpush1.msra.mxu0 %v932
  %997 = vmatprep.subr.mxu0 0.0
  %998 = vmatpush1.msra.mxu0 %v933
  %999 = vmatprep.subr.mxu0 0.0
  %1000 = vmatpush1.msra.mxu0 %v934
  %1001 = vmatprep.subr.mxu0 0.0
  %1002 = vmatpush1.msra.mxu0 %v935
  %1003 = vmatprep.subr.mxu0 0.0
  %1004 = vmatpush1.msra.mxu0 %v936
  %1005 = vmatprep.subr.mxu0 0.0
  %1006 = vmatpush1.msra.mxu0 %v937
  %1007 = vmatprep.subr.mxu0 0.0
  %1008 = vmatpush1.msra.mxu0 %v938
  %1009 = vmatprep.subr.mxu0 0.0
  %1010 = vmatpush1.msra.mxu0 %v939
  %1011 = vmatprep.subr.mxu0 0.0
  %1012 = vmatpush1.msra.mxu0 %v940
  %1013 = vmatprep.subr.mxu0 0.0
  %1014 = vmatpush1.msra.mxu0 %v941
  %1015 = vmatprep.subr.mxu0 0.0
  %1016 = vmatpush1.msra.mxu0 %v942
  %1017 = vmatprep.subr.mxu0 0.0
  %1018 = vmatpush1.msra.mxu0 %v943
  %1019 = vmatprep.subr.mxu0 0.0
  %1020 = vmatpush1.msra.mxu0 %v944
  %1021 = vmatprep.subr.mxu0 0.0
  %1022 = vmatpush1.msra.mxu0 %v945
  %1023 = vmatprep.subr.mxu0 0.0
  %1024 = vmatpush1.msra.mxu0 %v946
  %1025 = vmatprep.subr.mxu0 0.0
  %1026 = vmatpush1.msra.mxu0 %v947
  %1027 = vmatprep.subr.mxu0 0.0
  %1028 = vmatpush1.msra.mxu0 %v948
  %1029 = vmatprep.mubr.f32.mxu0 %v737
  %1030 = vmatmul.mubr.f32.gmra.mrb[0].mxu0 %v736
  %v1031 = vpop.f32.mrb[0].mxu0
  %v1032 = vadd.f32 0.0, %v1031
  %v1033 = vpop.f32.mrb[0].mxu0
  %1034 = vdwg.mxu0
  %1035 = vmatprep.subr.mxu0 0.0
  %1036 = vmatpush1.msra.mxu0 %v949
  %1037 = vmatprep.subr.mxu0 0.0
  %1038 = vmatpush1.msra.mxu0 %v950
  %1039 = vmatprep.subr.mxu0 0.0
  %1040 = vmatpush1.msra.mxu0 %v951
  %1041 = vmatprep.subr.mxu0 0.0
  %1042 = vmatpush1.msra.mxu0 %v952
  %1043 = vmatprep.subr.mxu0 0.0
  %1044 = vmatpush1.msra.mxu0 %v953
  %1045 = vmatprep.subr.mxu0 0.0
  %1046 = vmatpush1.msra.mxu0 %v954
  %1047 = vmatprep.subr.mxu0 0.0
  %1048 = vmatpush1.msra.mxu0 %v955
  %1049 = vmatprep.subr.mxu0 0.0
  %1050 = vmatpush1.msra.mxu0 %v956
  %1051 = vmatprep.subr.mxu0 0.0
  %1052 = vmatpush1.msra.mxu0 %v957
  %1053 = vmatprep.subr.mxu0 0.0
  %1054 = vmatpush1.msra.mxu0 %v958
  %1055 = vmatprep.subr.mxu0 0.0
  %1056 = vmatpush1.msra.mxu0 %v959
  %1057 = vmatprep.subr.mxu0 0.0
  %1058 = vmatpush1.msra.mxu0 %v960
  %1059 = vmatprep.subr.mxu0 0.0
  %1060 = vmatpush1.msra.mxu0 %v961
  %1061 = vmatprep.subr.mxu0 0.0
  %1062 = vmatpush1.msra.mxu0 %v962
  %1063 = vmatprep.subr.mxu0 0.0
  %1064 = vmatpush1.msra.mxu0 %v963
  %1065 = vmatprep.subr.mxu0 0.0
  %1066 = vmatpush1.msra.mxu0 %v964
  %1067 = vmatprep.subr.mxu0 0.0
  %1068 = vmatpush1.msra.mxu0 0.0
  %1069 = vmatprep.subr.mxu0 0.0
  %1070 = vmatpush1.msra.mxu0 0.0
  %1071 = vmatprep.subr.mxu0 0.0
  %1072 = vmatpush1.msra.mxu0 0.0
  %1073 = vmatprep.subr.mxu0 0.0
  %1074 = vmatpush1.msra.mxu0 0.0
  %1075 = vmatprep.subr.mxu0 0.0
  %1076 = vmatpush1.msra.mxu0 0.0
  %1077 = vmatprep.subr.mxu0 0.0
  %1078 = vmatpush1.msra.mxu0 0.0
  %1079 = vmatprep.subr.mxu0 0.0
  %1080 = vmatpush1.msra.mxu0 0.0
  %1081 = vmatprep.subr.mxu0 0.0
  %1082 = vmatpush1.msra.mxu0 0.0
  %1083 = vmatprep.subr.mxu0 0.0
  %1084 = vmatpush1.msra.mxu0 0.0
  %1085 = vmatprep.subr.mxu0 0.0
  %1086 = vmatpush1.msra.mxu0 0.0
  %1087 = vmatprep.subr.mxu0 0.0
  %1088 = vmatpush1.msra.mxu0 0.0
  %1089 = vmatprep.subr.mxu0 0.0
  %1090 = vmatpush1.msra.mxu0 0.0
  %1091 = vmatprep.subr.mxu0 0.0
  %1092 = vmatpush1.msra.mxu0 0.0
  %1093 = vmatprep.subr.mxu0 0.0
  %1094 = vmatpush1.msra.mxu0 0.0
  %1095 = vmatprep.subr.mxu0 0.0
  %1096 = vmatpush1.msra.mxu0 0.0
  %1097 = vmatprep.subr.mxu0 0.0
  %1098 = vmatpush1.msra.mxu0 0.0
  %1099 = vmatprep.mubr.f32.mxu0 0.0
  %1100 = vmatmul.mubr.f32.gmra.mrb[0].mxu0 %v738
  %v1101 = vpop.f32.mrb[0].mxu0
  %v1102 = vadd.f32 %v1032, %v1101
  %v1103 = vpop.f32.mrb[0].mxu0
  %1104 = vdwg.mxu0
  %1105 = vst [vmem:[%s7] sm:$0xff] %v1102
  %1110 = vrot.lane.b32.xlu0 %v736, 127
  %v1111 = vpop.permute.xlu0 %1110
  %1112 = vrot.lane.b32.xlu0 %v737, 127
  %v1113 = vpop.permute.xlu0 %1112
  %1114 = vrot.lane.b32.xlu0 %v738, 127
  %v1115 = vpop.permute.xlu0 %1114
  %1116 = vrot.lane.b32.xlu0 0.0, 127
  %v1117 = vpop.permute.xlu0 %1116
  %vm1118 = vcmask 1039360
  %v1119 = vsel %vm1118, %v1111, %v1113
  %v1120 = vsel %vm1118, %v1113, %v1115
  %v1121 = vsel %vm1118, %v1115, %v1117
  %1125 = vrot.lane.b32.xlu0 %v736, 126
  %v1126 = vpop.permute.xlu0 %1125
  %1127 = vrot.lane.b32.xlu0 %v737, 126
  %v1128 = vpop.permute.xlu0 %1127
  %1129 = vrot.lane.b32.xlu0 %v738, 126
  %v1130 = vpop.permute.xlu0 %1129
  %1131 = vrot.lane.b32.xlu0 0.0, 126
  %v1132 = vpop.permute.xlu0 %1131
  %vm1133 = vcmask 1031168
  %v1134 = vsel %vm1133, %v1126, %v1128
  %v1135 = vsel %vm1133, %v1128, %v1130
  %v1136 = vsel %vm1133, %v1130, %v1132
  %1140 = vrot.lane.b32.xlu0 %v736, 118
  %v1141 = vpop.permute.xlu0 %1140
  %1142 = vrot.lane.b32.xlu0 %v737, 118
  %v1143 = vpop.permute.xlu0 %1142
  %1144 = vrot.lane.b32.xlu0 %v738, 118
  %v1145 = vpop.permute.xlu0 %1144
  %1146 = vrot.lane.b32.xlu0 0.0, 118
  %v1147 = vpop.permute.xlu0 %1146
  %vm1148 = vcmask 965632
  %v1149 = vsel %vm1148, %v1141, %v1143
  %v1150 = vsel %vm1148, %v1143, %v1145
  %v1151 = vsel %vm1148, %v1145, %v1147
  %1155 = vrot.lane.b32.xlu0 %v736, 117
  %v1156 = vpop.permute.xlu0 %1155
  %1157 = vrot.lane.b32.xlu0 %v737, 117
  %v1158 = vpop.permute.xlu0 %1157
  %1159 = vrot.lane.b32.xlu0 %v738, 117
  %v1160 = vpop.permute.xlu0 %1159
  %1161 = vrot.lane.b32.xlu0 0.0, 117
  %v1162 = vpop.permute.xlu0 %1161
  %vm1163 = vcmask 957440
  %v1164 = vsel %vm1163, %v1156, %v1158
  %v1165 = vsel %vm1163, %v1158, %v1160
  %v1166 = vsel %vm1163, %v1160, %v1162
  %1170 = vrot.lane.b32.xlu0 %v736, 116
  %v1171 = vpop.permute.xlu0 %1170
  %1172 = vrot.lane.b32.xlu0 %v737, 116
  %v1173 = vpop.permute.xlu0 %1172
  %1174 = vrot.lane.b32.xlu0 %v738, 116
  %v1175 = vpop.permute.xlu0 %1174
  %1176 = vrot.lane.b32.xlu0 0.0, 116
  %v1177 = vpop.permute.xlu0 %1176
  %vm1178 = vcmask 949248
  %v1179 = vsel %vm1178, %v1171, %v1173
  %v1180 = vsel %vm1178, %v1173, %v1175
  %v1181 = vsel %vm1178, %v1175, %v1177
  %1185 = vrot.lane.b32.xlu0 %v736, 108
  %v1186 = vpop.permute.xlu0 %1185
  %1187 = vrot.lane.b32.xlu0 %v737, 108
  %v1188 = vpop.permute.xlu0 %1187
  %1189 = vrot.lane.b32.xlu0 %v738, 108
  %v1190 = vpop.permute.xlu0 %1189
  %1191 = vrot.lane.b32.xlu0 0.0, 108
  %v1192 = vpop.permute.xlu0 %1191
  %vm1193 = vcmask 883712
  %v1194 = vsel %vm1193, %v1186, %v1188
  %v1195 = vsel %vm1193, %v1188, %v1190
  %v1196 = vsel %vm1193, %v1190, %v1192
  %1200 = vrot.lane.b32.xlu0 %v736, 107
  %v1201 = vpop.permute.xlu0 %1200
  %1202 = vrot.lane.b32.xlu0 %v737, 107
  %v1203 = vpop.permute.xlu0 %1202
  %1204 = vrot.lane.b32.xlu0 %v738, 107
  %v1205 = vpop.permute.xlu0 %1204
  %1206 = vrot.lane.b32.xlu0 0.0, 107
  %v1207 = vpop.permute.xlu0 %1206
  %vm1208 = vcmask 875520
  %v1209 = vsel %vm1208, %v1201, %v1203
  %v1210 = vsel %vm1208, %v1203, %v1205
  %v1211 = vsel %vm1208, %v1205, %v1207
  %1215 = vrot.lane.b32.xlu0 %v736, 106
  %v1216 = vpop.permute.xlu0 %1215
  %1217 = vrot.lane.b32.xlu0 %v737, 106
  %v1218 = vpop.permute.xlu0 %1217
  %1219 = vrot.lane.b32.xlu0 %v738, 106
  %v1220 = vpop.permute.xlu0 %1219
  %1221 = vrot.lane.b32.xlu0 0.0, 106
  %v1222 = vpop.permute.xlu0 %1221
  %vm1223 = vcmask 867328
  %v1224 = vsel %vm1223, %v1216, %v1218
  %v1225 = vsel %vm1223, %v1218, %v1220
  %v1226 = vsel %vm1223, %v1220, %v1222
  %v1230 = vpack.c.bf16 %v1119, %v736
  %v1231 = vpack.c.bf16 %v1120, %v737
  %v1232 = vpack.c.bf16 %v1121, %v738
  %v1233 = vpack.c.bf16 %v1149, %v1134
  %v1234 = vpack.c.bf16 %v1150, %v1135
  %v1235 = vpack.c.bf16 %v1151, %v1136
  %v1236 = vpack.c.bf16 %v1179, %v1164
  %v1237 = vpack.c.bf16 %v1180, %v1165
  %v1238 = vpack.c.bf16 %v1181, %v1166
  %v1239 = vpack.c.bf16 %v1209, %v1194
  %v1240 = vpack.c.bf16 %v1210, %v1195
  %v1241 = vpack.c.bf16 %v1211, %v1196
  %v1242 = vpack.c.bf16 %v1224, %v1224
  %v1243 = vpack.c.bf16 %v1225, %v1225
  %v1244 = vpack.c.bf16 %v1226, %v1226
  %v1245 = vld [vmem:[%s5] sm:$0xff]
  %v1246 = vld [vmem:[%s4] sm:$0xf]
  %vm1247 = vcmask 588800
  %v1249 = vsel %vm1247, %v1246, 0
  %vm1251 = vcmask 1043456
  %v1253 = vsel %vm1251, %v1242, 0
  %v1256 = vsel %vm1251, %v1243, 0
  %v1259 = vsel %vm1251, %v1244, 0
  %1261 = vmatprep.subr.bf16.mxu0 %v1231
  %1262 = vmatpush1.bf16.msra.mxu0 %v1230
  %1263 = vmatprep.subr.bf16.mxu0 %v1234
  %1264 = vmatpush1.bf16.msra.mxu0 %v1233
  %1265 = vmatprep.subr.bf16.mxu0 %v1237
  %1266 = vmatpush1.bf16.msra.mxu0 %v1236
  %1267 = vmatprep.subr.bf16.mxu0 %v1240
  %1268 = vmatpush1.bf16.msra.mxu0 %v1239
  %1269 = vmatprep.subr.bf16.mxu0 %v1256
  %1270 = vmatpush1.bf16.msra.mxu0 %v1253
  %1271 = vmatprep.subr.bf16.mxu0 0
  %1272 = vmatpush1.bf16.msra.mxu0 0
  %1273 = vmatprep.subr.bf16.mxu0 0
  %1274 = vmatpush1.bf16.msra.mxu0 0
  %1275 = vmatprep.subr.bf16.mxu0 0
  %1276 = vmatpush1.bf16.msra.mxu0 0
  %1277 = vmatprep.subr.bf16.mxu0 0
  %1278 = vmatpush1.bf16.msra.mxu0 0
  %1279 = vmatprep.subr.bf16.mxu0 0
  %1280 = vmatpush1.bf16.msra.mxu0 0
  %1281 = vmatprep.subr.bf16.mxu0 0
  %1282 = vmatpush1.bf16.msra.mxu0 0
  %1283 = vmatprep.subr.bf16.mxu0 0
  %1284 = vmatpush1.bf16.msra.mxu0 0
  %1285 = vmatprep.subr.bf16.mxu0 0
  %1286 = vmatpush1.bf16.msra.mxu0 0
  %1287 = vmatprep.subr.bf16.mxu0 0
  %1288 = vmatpush1.bf16.msra.mxu0 0
  %1289 = vmatprep.subr.bf16.mxu0 0
  %1290 = vmatpush1.bf16.msra.mxu0 0
  %1291 = vmatprep.subr.bf16.mxu0 0
  %1292 = vmatpush1.bf16.msra.mxu0 0
  %1293 = vmatprep.mubr.bf16.mxu0 0
  %1294 = vmatmul.mubr.bf16.gmra.mrb[0].mxu0 %v1249
  %v1295 = vpop.f32.mrb[0].mxu0
  %v1296 = vadd.f32 0.0, %v1295
  %v1297 = vpop.f32.mrb[0].mxu0
  %v1298 = vadd.f32 0.0, %v1297
  %v1299 = vpop.f32.mrb[0].mxu0
  %v1300 = vpop.f32.mrb[0].mxu0
  %1301 = vdwg.mxu0
  %1302 = vmatprep.subr.bf16.mxu0 0
  %1303 = vmatpush1.bf16.msra.mxu0 %v1232
  %1304 = vmatprep.subr.bf16.mxu0 0
  %1305 = vmatpush1.bf16.msra.mxu0 %v1235
  %1306 = vmatprep.subr.bf16.mxu0 0
  %1307 = vmatpush1.bf16.msra.mxu0 %v1238
  %1308 = vmatprep.subr.bf16.mxu0 0
  %1309 = vmatpush1.bf16.msra.mxu0 %v1241
  %1310 = vmatprep.subr.bf16.mxu0 0
  %1311 = vmatpush1.bf16.msra.mxu0 %v1259
  %1312 = vmatprep.subr.bf16.mxu0 0
  %1313 = vmatpush1.bf16.msra.mxu0 0
  %1314 = vmatprep.subr.bf16.mxu0 0
  %1315 = vmatpush1.bf16.msra.mxu0 0
  %1316 = vmatprep.subr.bf16.mxu0 0
  %1317 = vmatpush1.bf16.msra.mxu0 0
  %1318 = vmatprep.subr.bf16.mxu0 0
  %1319 = vmatpush1.bf16.msra.mxu0 0
  %1320 = vmatprep.subr.bf16.mxu0 0
  %1321 = vmatpush1.bf16.msra.mxu0 0
  %1322 = vmatprep.subr.bf16.mxu0 0
  %1323 = vmatpush1.bf16.msra.mxu0 0
  %1324 = vmatprep.subr.bf16.mxu0 0
  %1325 = vmatpush1.bf16.msra.mxu0 0
  %1326 = vmatprep.subr.bf16.mxu0 0
  %1327 = vmatpush1.bf16.msra.mxu0 0
  %1328 = vmatprep.subr.bf16.mxu0 0
  %1329 = vmatpush1.bf16.msra.mxu0 0
  %1330 = vmatprep.subr.bf16.mxu0 0
  %1331 = vmatpush1.bf16.msra.mxu0 0
  %1332 = vmatprep.subr.bf16.mxu0 0
  %1333 = vmatpush1.bf16.msra.mxu0 0
  %1334 = vmatprep.mubr.bf16.mxu0 0
  %1335 = vmatmul.mubr.bf16.gmra.mrb[0].mxu0 %v1249
  %v1336 = vpop.f32.mrb[0].mxu0
  %v1337 = vadd.f32 0.0, %v1336
  %v1338 = vpop.f32.mrb[0].mxu0
  %v1339 = vpop.f32.mrb[0].mxu0
  %v1340 = vpop.f32.mrb[0].mxu0
  %1341 = vdwg.mxu0
  %1343 = vset.pattern.permute.xlu0 0
  %1344 = vperm.xlu0 %1343, %v1245
  %v1345 = vpop.permute.xlu0 %1344
  %v1347 = vadd.f32 %v1345, %v1296
  %v1348 = vadd.f32 %v1345, %v1298
  %v1349 = vadd.f32 %v1345, %v1337
  %1350 = vst [vmem:[%s6] sm:$0xff] %v1347
  %1351 = vst [vmem:[%s6 + $0x8] sm:$0xff] %v1348
  %1352 = vst [vmem:[%s6 + $0x10] sm:$0xff] %v1349
  // Predicated region
  $region26: #{block_x_forward.1} parent=0 // pred_check
    _
  $region27: #{block_x_forward.1} parent=0 // pred_check_branch
    %1354 = sbr.rel (0) target = $region29
  $region28: #{block_x_forward.1} parent=0 // pred_region
    _
  $region29: #{block_x_forward.1} parent=0 // pred_fallthru
    _
  // Predicated region
  $region30: #{block_x_forward.1} parent=0 // pred_check
    _
  $region31: #{block_x_forward.1} parent=0 // pred_check_branch
    %1356 = sbr.rel (0) target = $region33
  $region32: #{block_x_forward.1} parent=0 // pred_region
    _
  $region33: #{block_x_forward.1} parent=0 // pred_fallthru
    _
  // Predicated region
  $region34: #{block_x_forward.1} parent=0 // pred_check
    _
  $region35: #{block_x_forward.1} parent=0 // pred_check_branch
    %1358 = sbr.rel (0) target = $region37
  $region36: #{block_x_forward.1} parent=0 // pred_region
    _
  $region37: #{block_x_forward.1} parent=0 // pred_fallthru
    _
  // Predicated region
  $region38: #{block_x_forward.1} parent=0 // pred_check
    _
  $region39: #{block_x_forward.1} parent=0 // pred_check_branch
    %1360 = sbr.rel (0) target = $region41
  $region40: #{block_x_forward.1} parent=0 // pred_region
    _
  $region41: #{block_x_forward.1} parent=0 // pred_fallthru
    _

</llo_original>
